<compile_context>
chip_gen: v6e
topology: v6e:2x2x1
jax: 0.10.0
libtpu: 0.0.40
codegen_flags: <defaults>
</compile_context>

<pallas_src>
import functools

import jax
import jax.numpy as jnp
from jax.experimental import pallas as pl
from jax.experimental.pallas import tpu as pltpu


def fused_rnn_fc_kernel(x_ref,        # (T, B, D)   time-major input (VMEM)
                        w_ih0_ref,    # (D, H)      VMEM
                        w_hh0_ref,    # (H, H)      VMEM
                        b0_ref,       # (1, H)      b_ih0 + b_hh0 (VMEM)
                        b1_ref,       # (1, H)      b_ih1 + b_hh1 (VMEM)
                        b_fc_ref,     # (1, C_pad)  VMEM
                        w_ih1_hbm,    # (H, H)      HBM (pl.ANY) -> manual DMA
                        w_hh1_hbm,    # (H, H)      HBM (pl.ANY) -> manual DMA
                        w_fc_hbm,     # (T, H, C_pad) HBM (pl.ANY) -> manual DMA
                        o_ref,        # (B, C_pad)  padded logits (VMEM)
                        pre_ref,      # scratch (T, B, H) f32 : hoisted pre-activations
                        h0_ref,       # scratch (T, B, H) f32 : layer-0 outputs
                        w_ih1_vmem,   # scratch (H, H)
                        w_hh1_vmem,   # scratch (H, H)
                        w_fc_vmem,    # scratch (T, H, C_pad)
                        dma_sem):     # DMA semaphores (3,)
    T, B, D = x_ref.shape
    H = w_hh0_ref.shape[0]

    # ---- Kick off layer-1 / FC weight DMAs now; they overlap with layer-0 compute.
    cp_ih1 = pltpu.make_async_copy(w_ih1_hbm, w_ih1_vmem, dma_sem.at[0])
    cp_hh1 = pltpu.make_async_copy(w_hh1_hbm, w_hh1_vmem, dma_sem.at[1])
    cp_fc = pltpu.make_async_copy(w_fc_hbm, w_fc_vmem, dma_sem.at[2])
    cp_ih1.start()
    cp_hh1.start()
    cp_fc.start()

    # ---------------- Layer 0: hoisted input projection (one big gemm) ------------
    x_flat = x_ref[...].reshape(T * B, D)
    pre0 = jnp.dot(x_flat, w_ih0_ref[...], preferred_element_type=jnp.float32)
    pre_ref[...] = (pre0 + b0_ref[...]).reshape(T, B, H)

    # ---------------- Layer 0: recurrence (unrolled, h carried in registers) ------
    w_hh0 = w_hh0_ref[...]
    h = jnp.tanh(pre_ref[0])                      # t = 0: h_prev == 0 -> skip matmul
    h0_ref[0] = h
    for t in range(1, T):                         # T static & tiny -> fully unrolled
        h = jnp.tanh(pre_ref[t] +
                     jnp.dot(h, w_hh0, preferred_element_type=jnp.float32))
        h0_ref[t] = h

    # ---------------- Layer 1: hoisted input projection ---------------------------
    cp_ih1.wait()                                 # W_ih1 must be resident now
    h0_flat = h0_ref[...].reshape(T * B, H)
    pre1 = jnp.dot(h0_flat, w_ih1_vmem[...], preferred_element_type=jnp.float32)
    pre_ref[...] = (pre1 + b1_ref[...]).reshape(T, B, H)

    # ------- Layer 1: recurrence fused with per-timestep FC accumulation ----------
    cp_hh1.wait()
    cp_fc.wait()
    w_hh1 = w_hh1_vmem[...]
    h = jnp.tanh(pre_ref[0])                      # t = 0: h_prev == 0 -> skip matmul
    acc = jnp.dot(h, w_fc_vmem[0], preferred_element_type=jnp.float32)
    for t in range(1, T):
        h = jnp.tanh(pre_ref[t] +
                     jnp.dot(h, w_hh1, preferred_element_type=jnp.float32))
        acc = acc + jnp.dot(h, w_fc_vmem[t], preferred_element_type=jnp.float32)

    o_ref[...] = acc + b_fc_ref[...]              # lane-dense (B, C_pad) store


def prepare_params(params):
    """One-time re-layout of PyTorch-convention params into kernel layout.

    Run OUTSIDE the per-call forward so the big weight transposes / FC reshape+pad
    are not re-executed (extra HBM traffic) on every forward call.
    """
    (w_ih0, w_hh0, b_ih0, b_hh0), (w_ih1, w_hh1, b_ih1, b_hh1) = params["rnn"]
    w_fc, b_fc = params["fc"]
    H = w_hh0.shape[0]
    C, TH = w_fc.shape
    T = TH // H
    C_pad = pl.cdiv(C, 128) * 128
    # FC weight (C, T*H) -> (T, H, C_pad) so logits = sum_t h1[t] @ w_fc[t]
    w_fc_thc = jnp.transpose(w_fc.reshape(C, T, H), (1, 2, 0))      # (T, H, C)
    w_fc_pad = jnp.pad(w_fc_thc, ((0, 0), (0, 0), (0, C_pad - C)))
    b_fc_pad = jnp.pad(b_fc, (0, C_pad - C))[None, :]               # (1, C_pad)
    return {
        "w_ih0_t": jnp.asarray(w_ih0.T, jnp.float32),
        "w_hh0_t": jnp.asarray(w_hh0.T, jnp.float32),
        "b0": (b_ih0 + b_hh0)[None, :].astype(jnp.float32),
        "w_ih1_t": jnp.asarray(w_ih1.T, jnp.float32),
        "w_hh1_t": jnp.asarray(w_hh1.T, jnp.float32),
        "b1": (b_ih1 + b_hh1)[None, :].astype(jnp.float32),
        "w_fc_pad": w_fc_pad.astype(jnp.float32),
        "b_fc_pad": b_fc_pad.astype(jnp.float32),
    }


@functools.partial(jax.jit, static_argnames=("num_classes",))
def rnn_forward(x_btd, prep, *, num_classes):
    """x_btd: (B, T, D) float32, batch_first like the PyTorch module; h0 = zeros."""
    B, T, D = x_btd.shape
    H = prep["w_hh0_t"].shape[0]
    C_pad = prep["w_fc_pad"].shape[2]
    B_pad = max(8, pl.cdiv(B, 8) * 8)             # sublane-align the batch

    x_tbd = jnp.transpose(x_btd, (1, 0, 2))       # (T, B, D)
    if B_pad != B:
        x_tbd = jnp.pad(x_tbd, ((0, 0), (0, B_pad - B), (0, 0)))

    out_pad = pl.pallas_call(
        fused_rnn_fc_kernel,
        out_shape=jax.ShapeDtypeStruct((B_pad, C_pad), jnp.float32),
        in_specs=[
            pl.BlockSpec(memory_space=pltpu.MemorySpace.VMEM),  # x
            pl.BlockSpec(memory_space=pltpu.MemorySpace.VMEM),  # w_ih0
            pl.BlockSpec(memory_space=pltpu.MemorySpace.VMEM),  # w_hh0
            pl.BlockSpec(memory_space=pltpu.MemorySpace.VMEM),  # b0
            pl.BlockSpec(memory_space=pltpu.MemorySpace.VMEM),  # b1
            pl.BlockSpec(memory_space=pltpu.MemorySpace.VMEM),  # b_fc
            pl.BlockSpec(memory_space=pl.ANY),                  # w_ih1 (HBM, manual DMA)
            pl.BlockSpec(memory_space=pl.ANY),                  # w_hh1 (HBM, manual DMA)
            pl.BlockSpec(memory_space=pl.ANY),                  # w_fc  (HBM, manual DMA)
        ],
        out_specs=pl.BlockSpec(memory_space=pltpu.MemorySpace.VMEM),
        scratch_shapes=[
            pltpu.VMEM((T, B_pad, H), jnp.float32),   # pre-activations
            pltpu.VMEM((T, B_pad, H), jnp.float32),   # layer-0 outputs
            pltpu.VMEM((H, H), jnp.float32),          # w_ih1 landing buffer
            pltpu.VMEM((H, H), jnp.float32),          # w_hh1 landing buffer
            pltpu.VMEM((T, H, C_pad), jnp.float32),   # w_fc landing buffer
            pltpu.SemaphoreType.DMA((3,)),
        ],
        compiler_params=pltpu.CompilerParams(vmem_limit_bytes=32 * 1024 * 1024),
    )(x_tbd, prep["w_ih0_t"], prep["w_hh0_t"], prep["b0"], prep["b1"],
      prep["b_fc_pad"], prep["w_ih1_t"], prep["w_hh1_t"], prep["w_fc_pad"])

    return out_pad[:B, :num_classes]


def init_params(key, input_feature_size, hidden_size, num_layers,
                num_classes, sequence_length):
    # Deterministic init matching PyTorch's default U(-1/sqrt(H), 1/sqrt(H)) scheme.
    params = {"rnn": []}
    k = 1.0 / float(hidden_size) ** 0.5
    keys = jax.random.split(key, num_layers * 4 + 2)
    idx = 0
    for layer in range(num_layers):
        d_in = input_feature_size if layer == 0 else hidden_size
        w_ih = jax.random.uniform(keys[idx], (hidden_size, d_in), minval=-k, maxval=k); idx += 1
        w_hh = jax.random.uniform(keys[idx], (hidden_size, hidden_size), minval=-k, maxval=k); idx += 1
        b_ih = jax.random.uniform(keys[idx], (hidden_size,), minval=-k, maxval=k); idx += 1
        b_hh = jax.random.uniform(keys[idx], (hidden_size,), minval=-k, maxval=k); idx += 1
        params["rnn"].append((w_ih, w_hh, b_ih, b_hh))
    fc_in = sequence_length * hidden_size
    kf = 1.0 / float(fc_in) ** 0.5
    w_fc = jax.random.uniform(keys[idx], (num_classes, fc_in), minval=-kf, maxval=kf); idx += 1
    b_fc = jax.random.uniform(keys[idx], (num_classes,), minval=-kf, maxval=kf)
    params["fc"] = (w_fc, b_fc)
    return params


def ref_forward(x_btd, params):
    # Pure-JAX reference mirroring torch.nn.RNN(batch_first=True) + Linear.
    B, T, _ = x_btd.shape
    h_layers = x_btd
    for (w_ih, w_hh, b_ih, b_hh) in params["rnn"]:
        H = w_hh.shape[0]
        h = jnp.zeros((B, H), jnp.float32)
        outs = []
        for t in range(T):
            h = jnp.tanh(h_layers[:, t, :] @ w_ih.T + b_ih + h @ w_hh.T + b_hh)
            outs.append(h)
        h_layers = jnp.stack(outs, axis=1)
    flat = h_layers.reshape(B, -1)
    w_fc, b_fc = params["fc"]
    return flat @ w_fc.T + b_fc


if __name__ == "__main__":
    # Small shapes consistent with the module (scaled down from D=512 / H=1024).
    # batch = 10 matches the module's input and exercises the batch-padding path.
    batch = 10
    sequence_length = 5
    input_feature_size = 128
    hidden_size = 256
    num_layers = 2
    num_classes = 3

    key = jax.random.PRNGKey(0)
    kx, kp = jax.random.split(key)
    x = jax.random.normal(kx, (batch, sequence_length, input_feature_size),
                          dtype=jnp.float32)
    params = init_params(kp, input_feature_size, hidden_size, num_layers,
                         num_classes, sequence_length)

    prep = jax.block_until_ready(prepare_params(params))   # one-time weight re-layout
    out = jax.block_until_ready(rnn_forward(x, prep, num_classes=num_classes))
    ref = ref_forward(x, params)
    assert out.shape == (batch, num_classes)
    assert bool(jnp.allclose(out, ref, atol=1e-4, rtol=1e-4)), \
        f"max abs err {float(jnp.max(jnp.abs(out - ref)))}"
    print("KERNEL_OK")
</pallas_src>

<mosaic_0001>
module attributes {stable_mosaic.version = 11 : i64} {
  func.func @fused_rnn_fc_kernel(%arg0: memref<5x16x128xf32, #tpu.memory_space<vmem>>, %arg1: memref<128x256xf32, #tpu.memory_space<vmem>>, %arg2: memref<256x256xf32, #tpu.memory_space<vmem>>, %arg3: memref<1x256xf32, #tpu.memory_space<vmem>>, %arg4: memref<1x256xf32, #tpu.memory_space<vmem>>, %arg5: memref<1x128xf32, #tpu.memory_space<vmem>>, %arg6: memref<256x256xf32, #tpu.memory_space<any>>, %arg7: memref<256x256xf32, #tpu.memory_space<any>>, %arg8: memref<5x256x128xf32, #tpu.memory_space<any>>, %arg9: memref<16x128xf32, #tpu.memory_space<vmem>>, %arg10: memref<5x16x256xf32, #tpu.memory_space<vmem>>, %arg11: memref<5x16x256xf32, #tpu.memory_space<vmem>>, %arg12: memref<256x256xf32, #tpu.memory_space<vmem>>, %arg13: memref<256x256xf32, #tpu.memory_space<vmem>>, %arg14: memref<5x256x128xf32, #tpu.memory_space<vmem>>, %arg15: memref<3x!tpu.dma_semaphore, #tpu.memory_space<semaphore_mem>>) attributes {dimension_semantics = [], scalar_prefetch = 0 : i64, scratch_operands = 6 : i64, tpu.core_type = #tpu.core_type<tc>} {
    %c0_i32 = arith.constant 0 : i32
    %0 = tpu.memref_slice %arg15[%c0_i32] : memref<3x!tpu.dma_semaphore, #tpu.memory_space<semaphore_mem>> -> memref<1x!tpu.dma_semaphore, #tpu.memory_space<semaphore_mem>>
    %1 = tpu.memref_squeeze %0 : memref<1x!tpu.dma_semaphore, #tpu.memory_space<semaphore_mem>> -> memref<!tpu.dma_semaphore, #tpu.memory_space<semaphore_mem>>
    tpu.enqueue_dma source(%arg6 : memref<256x256xf32, #tpu.memory_space<any>>) target(%arg12 : memref<256x256xf32, #tpu.memory_space<vmem>>) target_semaphore(%1 : memref<!tpu.dma_semaphore, #tpu.memory_space<semaphore_mem>>)
    %c1_i32 = arith.constant 1 : i32
    %2 = tpu.memref_slice %arg15[%c1_i32] : memref<3x!tpu.dma_semaphore, #tpu.memory_space<semaphore_mem>> -> memref<1x!tpu.dma_semaphore, #tpu.memory_space<semaphore_mem>>
    %3 = tpu.memref_squeeze %2 : memref<1x!tpu.dma_semaphore, #tpu.memory_space<semaphore_mem>> -> memref<!tpu.dma_semaphore, #tpu.memory_space<semaphore_mem>>
    tpu.enqueue_dma source(%arg7 : memref<256x256xf32, #tpu.memory_space<any>>) target(%arg13 : memref<256x256xf32, #tpu.memory_space<vmem>>) target_semaphore(%3 : memref<!tpu.dma_semaphore, #tpu.memory_space<semaphore_mem>>)
    %c2_i32 = arith.constant 2 : i32
    %4 = tpu.memref_slice %arg15[%c2_i32] : memref<3x!tpu.dma_semaphore, #tpu.memory_space<semaphore_mem>> -> memref<1x!tpu.dma_semaphore, #tpu.memory_space<semaphore_mem>>
    %5 = tpu.memref_squeeze %4 : memref<1x!tpu.dma_semaphore, #tpu.memory_space<semaphore_mem>> -> memref<!tpu.dma_semaphore, #tpu.memory_space<semaphore_mem>>
    tpu.enqueue_dma source(%arg8 : memref<5x256x128xf32, #tpu.memory_space<any>>) target(%arg14 : memref<5x256x128xf32, #tpu.memory_space<vmem>>) target_semaphore(%5 : memref<!tpu.dma_semaphore, #tpu.memory_space<semaphore_mem>>)
    %c0 = arith.constant 0 : index
    %c0_0 = arith.constant 0 : index
    %c0_1 = arith.constant 0 : index
    %6 = vector.load %arg0[%c0, %c0_0, %c0_1] : memref<5x16x128xf32, #tpu.memory_space<vmem>>, vector<5x16x128xf32>
    %7 = vector.shape_cast %6 : vector<5x16x128xf32> to vector<80x128xf32>
    %c0_2 = arith.constant 0 : index
    %c0_3 = arith.constant 0 : index
    %8 = vector.load %arg1[%c0_2, %c0_3] : memref<128x256xf32, #tpu.memory_space<vmem>>, vector<128x256xf32>
    %cst = arith.constant dense<0.000000e+00> : vector<80x256xf32>
    %9 = tpu.matmul %7, %8, %cst {dimension_numbers = #tpu.dot_dimension_numbers<[1], [0], [0], [1], [0, 0, 1, 1], [], []>} : vector<80x128xf32>, vector<128x256xf32>, vector<80x256xf32> -> vector<80x256xf32>
    %c0_4 = arith.constant 0 : index
    %c0_5 = arith.constant 0 : index
    %10 = vector.load %arg3[%c0_4, %c0_5] : memref<1x256xf32, #tpu.memory_space<vmem>>, vector<1x256xf32>
    %11 = vector.broadcast %10 : vector<1x256xf32> to vector<80x256xf32>
    %12 = arith.addf %9, %11 : vector<80x256xf32>
    %13 = vector.shape_cast %12 : vector<80x256xf32> to vector<5x16x256xf32>
    %c0_6 = arith.constant 0 : index
    %c0_7 = arith.constant 0 : index
    %c0_8 = arith.constant 0 : index
    %14 = vector.load %arg10[%c0_6, %c0_7, %c0_8] : memref<5x16x256xf32, #tpu.memory_space<vmem>>, vector<5x16x256xf32>
    tpu.vector_store %arg10[%c0_6, %c0_7, %c0_8], %13 {strides = array<i32>} : memref<5x16x256xf32, #tpu.memory_space<vmem>>, vector<5x16x256xf32>,
    %c0_9 = arith.constant 0 : index
    %c0_10 = arith.constant 0 : index
    %15 = vector.load %arg2[%c0_9, %c0_10] : memref<256x256xf32, #tpu.memory_space<vmem>>, vector<256x256xf32>
    %c0_11 = arith.constant 0 : index
    %c0_12 = arith.constant 0 : index
    %c0_13 = arith.constant 0 : index
    %16 = vector.load %arg10[%c0_11, %c0_12, %c0_13] : memref<5x16x256xf32, #tpu.memory_space<vmem>>, vector<1x16x256xf32>
    %17 = vector.shape_cast %16 : vector<1x16x256xf32> to vector<16x256xf32>
    %18 = math.tanh %17 : vector<16x256xf32>
    %c0_14 = arith.constant 0 : index
    %c0_15 = arith.constant 0 : index
    %c0_16 = arith.constant 0 : index
    %19 = vector.load %arg11[%c0_14, %c0_15, %c0_16] : memref<5x16x256xf32, #tpu.memory_space<vmem>>, vector<1x16x256xf32>
    %20 = vector.shape_cast %19 : vector<1x16x256xf32> to vector<16x256xf32>
    %21 = vector.shape_cast %18 : vector<16x256xf32> to vector<1x16x256xf32>
    tpu.vector_store %arg11[%c0_14, %c0_15, %c0_16], %21 {strides = array<i32>} : memref<5x16x256xf32, #tpu.memory_space<vmem>>, vector<1x16x256xf32>,
    %c1 = arith.constant 1 : index
    %c0_17 = arith.constant 0 : index
    %c0_18 = arith.constant 0 : index
    %22 = vector.load %arg10[%c1, %c0_17, %c0_18] : memref<5x16x256xf32, #tpu.memory_space<vmem>>, vector<1x16x256xf32>
    %23 = vector.shape_cast %22 : vector<1x16x256xf32> to vector<16x256xf32>
    %cst_19 = arith.constant dense<0.000000e+00> : vector<16x256xf32>
    %24 = tpu.matmul %18, %15, %cst_19 {dimension_numbers = #tpu.dot_dimension_numbers<[1], [0], [0], [1], [0, 0, 1, 1], [], []>} : vector<16x256xf32>, vector<256x256xf32>, vector<16x256xf32> -> vector<16x256xf32>
    %25 = arith.addf %23, %24 : vector<16x256xf32>
    %26 = math.tanh %25 : vector<16x256xf32>
    %c1_20 = arith.constant 1 : index
    %c0_21 = arith.constant 0 : index
    %c0_22 = arith.constant 0 : index
    %27 = vector.load %arg11[%c1_20, %c0_21, %c0_22] : memref<5x16x256xf32, #tpu.memory_space<vmem>>, vector<1x16x256xf32>
    %28 = vector.shape_cast %27 : vector<1x16x256xf32> to vector<16x256xf32>
    %29 = vector.shape_cast %26 : vector<16x256xf32> to vector<1x16x256xf32>
    tpu.vector_store %arg11[%c1_20, %c0_21, %c0_22], %29 {strides = array<i32>} : memref<5x16x256xf32, #tpu.memory_space<vmem>>, vector<1x16x256xf32>,
    %c2 = arith.constant 2 : index
    %c0_23 = arith.constant 0 : index
    %c0_24 = arith.constant 0 : index
    %30 = vector.load %arg10[%c2, %c0_23, %c0_24] : memref<5x16x256xf32, #tpu.memory_space<vmem>>, vector<1x16x256xf32>
    %31 = vector.shape_cast %30 : vector<1x16x256xf32> to vector<16x256xf32>
    %cst_25 = arith.constant dense<0.000000e+00> : vector<16x256xf32>
    %32 = tpu.matmul %26, %15, %cst_25 {dimension_numbers = #tpu.dot_dimension_numbers<[1], [0], [0], [1], [0, 0, 1, 1], [], []>} : vector<16x256xf32>, vector<256x256xf32>, vector<16x256xf32> -> vector<16x256xf32>
    %33 = arith.addf %31, %32 : vector<16x256xf32>
    %34 = math.tanh %33 : vector<16x256xf32>
    %c2_26 = arith.constant 2 : index
    %c0_27 = arith.constant 0 : index
    %c0_28 = arith.constant 0 : index
    %35 = vector.load %arg11[%c2_26, %c0_27, %c0_28] : memref<5x16x256xf32, #tpu.memory_space<vmem>>, vector<1x16x256xf32>
    %36 = vector.shape_cast %35 : vector<1x16x256xf32> to vector<16x256xf32>
    %37 = vector.shape_cast %34 : vector<16x256xf32> to vector<1x16x256xf32>
    tpu.vector_store %arg11[%c2_26, %c0_27, %c0_28], %37 {strides = array<i32>} : memref<5x16x256xf32, #tpu.memory_space<vmem>>, vector<1x16x256xf32>,
    %c3 = arith.constant 3 : index
    %c0_29 = arith.constant 0 : index
    %c0_30 = arith.constant 0 : index
    %38 = vector.load %arg10[%c3, %c0_29, %c0_30] : memref<5x16x256xf32, #tpu.memory_space<vmem>>, vector<1x16x256xf32>
    %39 = vector.shape_cast %38 : vector<1x16x256xf32> to vector<16x256xf32>
    %cst_31 = arith.constant dense<0.000000e+00> : vector<16x256xf32>
    %40 = tpu.matmul %34, %15, %cst_31 {dimension_numbers = #tpu.dot_dimension_numbers<[1], [0], [0], [1], [0, 0, 1, 1], [], []>} : vector<16x256xf32>, vector<256x256xf32>, vector<16x256xf32> -> vector<16x256xf32>
    %41 = arith.addf %39, %40 : vector<16x256xf32>
    %42 = math.tanh %41 : vector<16x256xf32>
    %c3_32 = arith.constant 3 : index
    %c0_33 = arith.constant 0 : index
    %c0_34 = arith.constant 0 : index
    %43 = vector.load %arg11[%c3_32, %c0_33, %c0_34] : memref<5x16x256xf32, #tpu.memory_space<vmem>>, vector<1x16x256xf32>
    %44 = vector.shape_cast %43 : vector<1x16x256xf32> to vector<16x256xf32>
    %45 = vector.shape_cast %42 : vector<16x256xf32> to vector<1x16x256xf32>
    tpu.vector_store %arg11[%c3_32, %c0_33, %c0_34], %45 {strides = array<i32>} : memref<5x16x256xf32, #tpu.memory_space<vmem>>, vector<1x16x256xf32>,
    %c4 = arith.constant 4 : index
    %c0_35 = arith.constant 0 : index
    %c0_36 = arith.constant 0 : index
    %46 = vector.load %arg10[%c4, %c0_35, %c0_36] : memref<5x16x256xf32, #tpu.memory_space<vmem>>, vector<1x16x256xf32>
    %47 = vector.shape_cast %46 : vector<1x16x256xf32> to vector<16x256xf32>
    %cst_37 = arith.constant dense<0.000000e+00> : vector<16x256xf32>
    %48 = tpu.matmul %42, %15, %cst_37 {dimension_numbers = #tpu.dot_dimension_numbers<[1], [0], [0], [1], [0, 0, 1, 1], [], []>} : vector<16x256xf32>, vector<256x256xf32>, vector<16x256xf32> -> vector<16x256xf32>
    %49 = arith.addf %47, %48 : vector<16x256xf32>
    %50 = math.tanh %49 : vector<16x256xf32>
    %c4_38 = arith.constant 4 : index
    %c0_39 = arith.constant 0 : index
    %c0_40 = arith.constant 0 : index
    %51 = vector.load %arg11[%c4_38, %c0_39, %c0_40] : memref<5x16x256xf32, #tpu.memory_space<vmem>>, vector<1x16x256xf32>
    %52 = vector.shape_cast %51 : vector<1x16x256xf32> to vector<16x256xf32>
    %53 = vector.shape_cast %50 : vector<16x256xf32> to vector<1x16x256xf32>
    tpu.vector_store %arg11[%c4_38, %c0_39, %c0_40], %53 {strides = array<i32>} : memref<5x16x256xf32, #tpu.memory_space<vmem>>, vector<1x16x256xf32>,
    %c0_i32_41 = arith.constant 0 : i32
    %54 = tpu.memref_slice %arg15[%c0_i32_41] : memref<3x!tpu.dma_semaphore, #tpu.memory_space<semaphore_mem>> -> memref<1x!tpu.dma_semaphore, #tpu.memory_space<semaphore_mem>>
    %55 = tpu.memref_squeeze %54 : memref<1x!tpu.dma_semaphore, #tpu.memory_space<semaphore_mem>> -> memref<!tpu.dma_semaphore, #tpu.memory_space<semaphore_mem>>
    tpu.wait_dma2 semaphore(%55 : memref<!tpu.dma_semaphore, #tpu.memory_space<semaphore_mem>>) src(%arg6 : memref<256x256xf32, #tpu.memory_space<any>>) dst(%arg12 : memref<256x256xf32, #tpu.memory_space<vmem>>)
    %c0_42 = arith.constant 0 : index
    %c0_43 = arith.constant 0 : index
    %c0_44 = arith.constant 0 : index
    %56 = vector.load %arg11[%c0_42, %c0_43, %c0_44] : memref<5x16x256xf32, #tpu.memory_space<vmem>>, vector<5x16x256xf32>
    %57 = vector.shape_cast %56 : vector<5x16x256xf32> to vector<80x256xf32>
    %c0_45 = arith.constant 0 : index
    %c0_46 = arith.constant 0 : index
    %58 = vector.load %arg12[%c0_45, %c0_46] : memref<256x256xf32, #tpu.memory_space<vmem>>, vector<256x256xf32>
    %cst_47 = arith.constant dense<0.000000e+00> : vector<80x256xf32>
    %59 = tpu.matmul %57, %58, %cst_47 {dimension_numbers = #tpu.dot_dimension_numbers<[1], [0], [0], [1], [0, 0, 1, 1], [], []>} : vector<80x256xf32>, vector<256x256xf32>, vector<80x256xf32> -> vector<80x256xf32>
    %c0_48 = arith.constant 0 : index
    %c0_49 = arith.constant 0 : index
    %60 = vector.load %arg4[%c0_48, %c0_49] : memref<1x256xf32, #tpu.memory_space<vmem>>, vector<1x256xf32>
    %61 = vector.broadcast %60 : vector<1x256xf32> to vector<80x256xf32>
    %62 = arith.addf %59, %61 : vector<80x256xf32>
    %63 = vector.shape_cast %62 : vector<80x256xf32> to vector<5x16x256xf32>
    %c0_50 = arith.constant 0 : index
    %c0_51 = arith.constant 0 : index
    %c0_52 = arith.constant 0 : index
    %64 = vector.load %arg10[%c0_50, %c0_51, %c0_52] : memref<5x16x256xf32, #tpu.memory_space<vmem>>, vector<5x16x256xf32>
    tpu.vector_store %arg10[%c0_50, %c0_51, %c0_52], %63 {strides = array<i32>} : memref<5x16x256xf32, #tpu.memory_space<vmem>>, vector<5x16x256xf32>,
    %c1_i32_53 = arith.constant 1 : i32
    %65 = tpu.memref_slice %arg15[%c1_i32_53] : memref<3x!tpu.dma_semaphore, #tpu.memory_space<semaphore_mem>> -> memref<1x!tpu.dma_semaphore, #tpu.memory_space<semaphore_mem>>
    %66 = tpu.memref_squeeze %65 : memref<1x!tpu.dma_semaphore, #tpu.memory_space<semaphore_mem>> -> memref<!tpu.dma_semaphore, #tpu.memory_space<semaphore_mem>>
    tpu.wait_dma2 semaphore(%66 : memref<!tpu.dma_semaphore, #tpu.memory_space<semaphore_mem>>) src(%arg7 : memref<256x256xf32, #tpu.memory_space<any>>) dst(%arg13 : memref<256x256xf32, #tpu.memory_space<vmem>>)
    %c2_i32_54 = arith.constant 2 : i32
    %67 = tpu.memref_slice %arg15[%c2_i32_54] : memref<3x!tpu.dma_semaphore, #tpu.memory_space<semaphore_mem>> -> memref<1x!tpu.dma_semaphore, #tpu.memory_space<semaphore_mem>>
    %68 = tpu.memref_squeeze %67 : memref<1x!tpu.dma_semaphore, #tpu.memory_space<semaphore_mem>> -> memref<!tpu.dma_semaphore, #tpu.memory_space<semaphore_mem>>
    tpu.wait_dma2 semaphore(%68 : memref<!tpu.dma_semaphore, #tpu.memory_space<semaphore_mem>>) src(%arg8 : memref<5x256x128xf32, #tpu.memory_space<any>>) dst(%arg14 : memref<5x256x128xf32, #tpu.memory_space<vmem>>)
    %c0_55 = arith.constant 0 : index
    %c0_56 = arith.constant 0 : index
    %69 = vector.load %arg13[%c0_55, %c0_56] : memref<256x256xf32, #tpu.memory_space<vmem>>, vector<256x256xf32>
    %c0_57 = arith.constant 0 : index
    %c0_58 = arith.constant 0 : index
    %c0_59 = arith.constant 0 : index
    %70 = vector.load %arg10[%c0_57, %c0_58, %c0_59] : memref<5x16x256xf32, #tpu.memory_space<vmem>>, vector<1x16x256xf32>
    %71 = vector.shape_cast %70 : vector<1x16x256xf32> to vector<16x256xf32>
    %72 = math.tanh %71 : vector<16x256xf32>
    %c0_60 = arith.constant 0 : index
    %c0_61 = arith.constant 0 : index
    %c0_62 = arith.constant 0 : index
    %73 = vector.load %arg14[%c0_60, %c0_61, %c0_62] : memref<5x256x128xf32, #tpu.memory_space<vmem>>, vector<1x256x128xf32>
    %74 = vector.shape_cast %73 : vector<1x256x128xf32> to vector<256x128xf32>
    %cst_63 = arith.constant dense<0.000000e+00> : vector<16x128xf32>
    %75 = tpu.matmul %72, %74, %cst_63 {dimension_numbers = #tpu.dot_dimension_numbers<[1], [0], [0], [1], [0, 0, 1, 1], [], []>} : vector<16x256xf32>, vector<256x128xf32>, vector<16x128xf32> -> vector<16x128xf32>
    %c1_64 = arith.constant 1 : index
    %c0_65 = arith.constant 0 : index
    %c0_66 = arith.constant 0 : index
    %76 = vector.load %arg10[%c1_64, %c0_65, %c0_66] : memref<5x16x256xf32, #tpu.memory_space<vmem>>, vector<1x16x256xf32>
    %77 = vector.shape_cast %76 : vector<1x16x256xf32> to vector<16x256xf32>
    %cst_67 = arith.constant dense<0.000000e+00> : vector<16x256xf32>
    %78 = tpu.matmul %72, %69, %cst_67 {dimension_numbers = #tpu.dot_dimension_numbers<[1], [0], [0], [1], [0, 0, 1, 1], [], []>} : vector<16x256xf32>, vector<256x256xf32>, vector<16x256xf32> -> vector<16x256xf32>
    %79 = arith.addf %77, %78 : vector<16x256xf32>
    %80 = math.tanh %79 : vector<16x256xf32>
    %c1_68 = arith.constant 1 : index
    %c0_69 = arith.constant 0 : index
    %c0_70 = arith.constant 0 : index
    %81 = vector.load %arg14[%c1_68, %c0_69, %c0_70] : memref<5x256x128xf32, #tpu.memory_space<vmem>>, vector<1x256x128xf32>
    %82 = vector.shape_cast %81 : vector<1x256x128xf32> to vector<256x128xf32>
    %cst_71 = arith.constant dense<0.000000e+00> : vector<16x128xf32>
    %83 = tpu.matmul %80, %82, %cst_71 {dimension_numbers = #tpu.dot_dimension_numbers<[1], [0], [0], [1], [0, 0, 1, 1], [], []>} : vector<16x256xf32>, vector<256x128xf32>, vector<16x128xf32> -> vector<16x128xf32>
    %84 = arith.addf %75, %83 : vector<16x128xf32>
    %c2_72 = arith.constant 2 : index
    %c0_73 = arith.constant 0 : index
    %c0_74 = arith.constant 0 : index
    %85 = vector.load %arg10[%c2_72, %c0_73, %c0_74] : memref<5x16x256xf32, #tpu.memory_space<vmem>>, vector<1x16x256xf32>
    %86 = vector.shape_cast %85 : vector<1x16x256xf32> to vector<16x256xf32>
    %cst_75 = arith.constant dense<0.000000e+00> : vector<16x256xf32>
    %87 = tpu.matmul %80, %69, %cst_75 {dimension_numbers = #tpu.dot_dimension_numbers<[1], [0], [0], [1], [0, 0, 1, 1], [], []>} : vector<16x256xf32>, vector<256x256xf32>, vector<16x256xf32> -> vector<16x256xf32>
    %88 = arith.addf %86, %87 : vector<16x256xf32>
    %89 = math.tanh %88 : vector<16x256xf32>
    %c2_76 = arith.constant 2 : index
    %c0_77 = arith.constant 0 : index
    %c0_78 = arith.constant 0 : index
    %90 = vector.load %arg14[%c2_76, %c0_77, %c0_78] : memref<5x256x128xf32, #tpu.memory_space<vmem>>, vector<1x256x128xf32>
    %91 = vector.shape_cast %90 : vector<1x256x128xf32> to vector<256x128xf32>
    %cst_79 = arith.constant dense<0.000000e+00> : vector<16x128xf32>
    %92 = tpu.matmul %89, %91, %cst_79 {dimension_numbers = #tpu.dot_dimension_numbers<[1], [0], [0], [1], [0, 0, 1, 1], [], []>} : vector<16x256xf32>, vector<256x128xf32>, vector<16x128xf32> -> vector<16x128xf32>
    %93 = arith.addf %84, %92 : vector<16x128xf32>
    %c3_80 = arith.constant 3 : index
    %c0_81 = arith.constant 0 : index
    %c0_82 = arith.constant 0 : index
    %94 = vector.load %arg10[%c3_80, %c0_81, %c0_82] : memref<5x16x256xf32, #tpu.memory_space<vmem>>, vector<1x16x256xf32>
    %95 = vector.shape_cast %94 : vector<1x16x256xf32> to vector<16x256xf32>
    %cst_83 = arith.constant dense<0.000000e+00> : vector<16x256xf32>
    %96 = tpu.matmul %89, %69, %cst_83 {dimension_numbers = #tpu.dot_dimension_numbers<[1], [0], [0], [1], [0, 0, 1, 1], [], []>} : vector<16x256xf32>, vector<256x256xf32>, vector<16x256xf32> -> vector<16x256xf32>
    %97 = arith.addf %95, %96 : vector<16x256xf32>
    %98 = math.tanh %97 : vector<16x256xf32>
    %c3_84 = arith.constant 3 : index
    %c0_85 = arith.constant 0 : index
    %c0_86 = arith.constant 0 : index
    %99 = vector.load %arg14[%c3_84, %c0_85, %c0_86] : memref<5x256x128xf32, #tpu.memory_space<vmem>>, vector<1x256x128xf32>
    %100 = vector.shape_cast %99 : vector<1x256x128xf32> to vector<256x128xf32>
    %cst_87 = arith.constant dense<0.000000e+00> : vector<16x128xf32>
    %101 = tpu.matmul %98, %100, %cst_87 {dimension_numbers = #tpu.dot_dimension_numbers<[1], [0], [0], [1], [0, 0, 1, 1], [], []>} : vector<16x256xf32>, vector<256x128xf32>, vector<16x128xf32> -> vector<16x128xf32>
    %102 = arith.addf %93, %101 : vector<16x128xf32>
    %c4_88 = arith.constant 4 : index
    %c0_89 = arith.constant 0 : index
    %c0_90 = arith.constant 0 : index
    %103 = vector.load %arg10[%c4_88, %c0_89, %c0_90] : memref<5x16x256xf32, #tpu.memory_space<vmem>>, vector<1x16x256xf32>
    %104 = vector.shape_cast %103 : vector<1x16x256xf32> to vector<16x256xf32>
    %cst_91 = arith.constant dense<0.000000e+00> : vector<16x256xf32>
    %105 = tpu.matmul %98, %69, %cst_91 {dimension_numbers = #tpu.dot_dimension_numbers<[1], [0], [0], [1], [0, 0, 1, 1], [], []>} : vector<16x256xf32>, vector<256x256xf32>, vector<16x256xf32> -> vector<16x256xf32>
    %106 = arith.addf %104, %105 : vector<16x256xf32>
    %107 = math.tanh %106 : vector<16x256xf32>
    %c4_92 = arith.constant 4 : index
    %c0_93 = arith.constant 0 : index
    %c0_94 = arith.constant 0 : index
    %108 = vector.load %arg14[%c4_92, %c0_93, %c0_94] : memref<5x256x128xf32, #tpu.memory_space<vmem>>, vector<1x256x128xf32>
    %109 = vector.shape_cast %108 : vector<1x256x128xf32> to vector<256x128xf32>
    %cst_95 = arith.constant dense<0.000000e+00> : vector<16x128xf32>
    %110 = tpu.matmul %107, %109, %cst_95 {dimension_numbers = #tpu.dot_dimension_numbers<[1], [0], [0], [1], [0, 0, 1, 1], [], []>} : vector<16x256xf32>, vector<256x128xf32>, vector<16x128xf32> -> vector<16x128xf32>
    %111 = arith.addf %102, %110 : vector<16x128xf32>
    %c0_96 = arith.constant 0 : index
    %c0_97 = arith.constant 0 : index
    %112 = vector.load %arg5[%c0_96, %c0_97] : memref<1x128xf32, #tpu.memory_space<vmem>>, vector<1x128xf32>
    %113 = vector.broadcast %112 : vector<1x128xf32> to vector<16x128xf32>
    %114 = arith.addf %111, %113 : vector<16x128xf32>
    %c0_98 = arith.constant 0 : index
    %c0_99 = arith.constant 0 : index
    %115 = vector.load %arg9[%c0_98, %c0_99] : memref<16x128xf32, #tpu.memory_space<vmem>>, vector<16x128xf32>
    tpu.vector_store %arg9[%c0_98, %c0_99], %114 {strides = array<i32>} : memref<16x128xf32, #tpu.memory_space<vmem>>, vector<16x128xf32>,
    return
  }
}

</mosaic_0001>

<llo_original>
// kernel: rnn_forward.1
$region0: #{rnn_forward.1}
  #allocation0 [shape = 'u32[]', space=smem, size = 0x4, offset = 0x4, fixed_abs, tag = 'smem constant byte address 0x4 - core index']
  #allocation1 [shape = 'u32[144,128]{1,0:T(1,128)}', space=vmem, size = 0x12000, scoped, tag = 'internal scratch']
  #allocation2 [shape = 'f32[5,16,256]{2,1,0:T(8,128)}', space=vmem, size = 0x14000, scoped, tag = 'scratch operand']
  #allocation3 [shape = 'f32[5,16,256]{2,1,0:T(8,128)}', space=vmem, size = 0x14000, scoped, tag = 'scratch operand']
  #allocation4 [shape = 'f32[256,256]{1,0:T(8,128)}', space=vmem, size = 0x40000, scoped, tag = 'scratch operand']
  #allocation5 [shape = 'f32[256,256]{1,0:T(8,128)}', space=vmem, size = 0x40000, scoped, tag = 'scratch operand']
  #allocation6 [shape = 'f32[5,256,128]{2,1,0:T(8,128)}', space=vmem, size = 0xa0000, scoped, tag = 'scratch operand']
  #allocation7 [shape = 's32[3]{0}', space=sflag, size = 0xc, scoped, tag = 'scratch operand']
  #allocation10 [shape = 's32[]', space=sflag, size = 0x4, offset = 0, fixed_abs, tag = 'sflag constant byte address 0x0 - dummy sync flag']
  #allocation11 [shape = 's32[]', space=sflag, size = 0x4, offset = 0, fixed_abs, tag = 'sflag constant byte address 0x0 - dummy sync flag']
  #allocation12 [shape = 'u32[]', space=smem, size = 0x4, offset = 0x44, fixed_abs, tag = 'smem constant byte address 0x44 - assertion arg 0']
  #allocation13 [shape = 'u32[]', space=smem, size = 0x4, offset = 0x48, fixed_abs, tag = 'smem constant byte address 0x48 - assertion arg 1']
  #allocation14 [shape = 's32[]', space=sflag, size = 0x4, offset = 0, fixed_abs, tag = 'sflag constant byte address 0x0 - dummy sync flag']
  #allocation15 [shape = 's32[]', space=sflag, size = 0x4, offset = 0, fixed_abs, tag = 'sflag constant byte address 0x0 - dummy sync flag']
  #allocation16 [shape = 's32[]', space=sflag, size = 0x4, offset = 0, fixed_abs, tag = 'sflag constant byte address 0x0 - dummy sync flag']
  #allocation17 [shape = 's32[]', space=sflag, size = 0x4, offset = 0, fixed_abs, tag = 'sflag constant byte address 0x0 - dummy sync flag']
  %s0 = inlined_call_operand.vmem [shape: f32[5,16,128], index: 0, kind: input, shape index: {}]
  %s1 = inlined_call_operand.vmem [shape: f32[128,256], index: 1, kind: input, shape index: {}]
  %s2 = inlined_call_operand.hbm [shape: f32[256,256], index: 2, kind: input, shape index: {}]
  %s3 = inlined_call_operand.vmem [shape: f32[1,256], index: 3, kind: input, shape index: {}]
  %s4 = inlined_call_operand.vmem [shape: f32[1,256], index: 4, kind: input, shape index: {}]
  %s5 = inlined_call_operand.vmem [shape: f32[1,128], index: 5, kind: input, shape index: {}]
  %s6 = inlined_call_operand.hbm [shape: f32[256,256], index: 6, kind: input, shape index: {}]
  %s7 = inlined_call_operand.hbm [shape: f32[256,256], index: 7, kind: input, shape index: {}]
  %s8 = inlined_call_operand.hbm [shape: f32[5,256,128], index: 8, kind: input, shape index: {}]
  %s9 = inlined_call_operand.vmem [shape: f32[16,128], index: 9, kind: output, shape index: {}]
  %s10 = sld [smem:[#allocation0]]
  $region50: #{rnn_forward.1} parent=0
    _
  %s12 = ssub.s32 1, %s10
  %s13 = scalar_select 0, %s12, %s10
  $region1: #{rnn_forward.1} parent=0
    #allocation8 [shape = 'u8[262144]{0}', space=vmem, size = 0x40000, scoped, tag = 'input window, operand 2, single buffered']
    #allocation9 [shape = 's32[1]{0}', space=sflag, size = 0x4, scoped, tag = 'scoped memory for rnn_forward.1']
    %14 = vsyncpa [#allocation9], 0
    // Predicated region
    $region2: #{rnn_forward.1} parent=1 // pred_check
      _
    $region3: #{rnn_forward.1} parent=1 // pred_check_branch
      %16 = sbr.rel (0) target = $region5
    $region4: #{rnn_forward.1} parent=1 // pred_region
      _
    $region5: #{rnn_forward.1} parent=1 // pred_fallthru
      _
    // Predicated region
    $region6: #{rnn_forward.1} parent=1 // pred_check
      _
    $region7: #{rnn_forward.1} parent=1 // pred_check_branch
      %18 = sbr.rel (0) target = $region9
    $region8: #{rnn_forward.1} parent=1 // pred_region
      _
    $region9: #{rnn_forward.1} parent=1 // pred_fallthru
      _
    // Predicated region
    $region10: #{rnn_forward.1} parent=1 // pred_check
      _
    $region11: #{rnn_forward.1} parent=1 // pred_check_branch
      %20 = sbr.rel (0) target = $region13
    $region12: #{rnn_forward.1} parent=1 // pred_region
      %s22 = ssub.s32 8192, 8192
      %23 = vsyncadd [#allocation9], %s22
      %s24 = sshll.u32 [#allocation8], 4
      %s25 = int_to_ptr.vmem [resolvable:$true] %s24
      %30 = dma.hbm_to_vmem [thread:$0]  %s2, 8192, %s25, [#allocation9], 256, 256, 16
    $region13: #{rnn_forward.1} parent=1 // pred_fallthru
      _
    // Predicated region
    $region14: #{rnn_forward.1} parent=1 // pred_check
      _
    $region15: #{rnn_forward.1} parent=1 // pred_check_branch
      %32 = sbr.rel (0) target = $region17
    $region16: #{rnn_forward.1} parent=1 // pred_region
      _
    $region17: #{rnn_forward.1} parent=1 // pred_fallthru
      _
    // Predicated region
    $region18: #{rnn_forward.1} parent=1 // pred_check
      _
    $region19: #{rnn_forward.1} parent=1 // pred_check_branch
      %34 = sbr.rel (0) target = $region21
    $region20: #{rnn_forward.1} parent=1 // pred_region
      _
    $region21: #{rnn_forward.1} parent=1 // pred_fallthru
      _
    // Predicated region
    $region22: #{rnn_forward.1} parent=1 // pred_check
      _
    $region23: #{rnn_forward.1} parent=1 // pred_check_branch
      %36 = sbr.rel (0) target = $region25
    $region24: #{rnn_forward.1} parent=1 // pred_region
      _
    $region25: #{rnn_forward.1} parent=1 // pred_fallthru
      _
    // Predicated region
    $region26: #{rnn_forward.1} parent=1 // pred_check
      _
    $region27: #{rnn_forward.1} parent=1 // pred_check_branch
      %38 = sbr.rel (0) target = $region29
    $region28: #{rnn_forward.1} parent=1 // pred_region
      %39 = dma.done [#allocation9], 8192
    $region29: #{rnn_forward.1} parent=1 // pred_fallthru
      _
    // Predicated region
    $region30: #{rnn_forward.1} parent=1 // pred_check
      _
    $region31: #{rnn_forward.1} parent=1 // pred_check_branch
      %41 = sbr.rel target = $region33
    $region32: #{rnn_forward.1} parent=1 // pred_region
      %42 = sst [smem:[#allocation12]] [#allocation11]
      %43 = sst [smem:[#allocation13]] [#allocation10]
    $region33: #{rnn_forward.1} parent=1 // pred_fallthru
      _
    %45 = shalt.err (0)
    %s47 = sshll.u32 [#allocation4], 4
    %s48 = int_to_ptr.vmem [resolvable:$true] %s47
    %50 = dma.hbm_to_vmem [thread:$0]  %s6, 8192, %s48, [#allocation7]
    %s51 = scalar_lea.sflag [#allocation7], 1
    // Predicated region
    $region34: #{rnn_forward.1} parent=1 // pred_check
      _
    $region35: #{rnn_forward.1} parent=1 // pred_check_branch
      %53 = sbr.rel target = $region37
    $region36: #{rnn_forward.1} parent=1 // pred_region
      %54 = sst [smem:[#allocation12]] [#allocation15]
      %55 = sst [smem:[#allocation13]] [#allocation14]
    $region37: #{rnn_forward.1} parent=1 // pred_fallthru
      _
    %57 = shalt.err (0)
    %s59 = sshll.u32 [#allocation5], 4
    %s60 = int_to_ptr.vmem [resolvable:$true] %s59
    %62 = dma.hbm_to_vmem [thread:$0]  %s7, 8192, %s60, %s51
    %s63 = scalar_lea.sflag [#allocation7], 2
    // Predicated region
    $region38: #{rnn_forward.1} parent=1 // pred_check
      _
    $region39: #{rnn_forward.1} parent=1 // pred_check_branch
      %65 = sbr.rel target = $region41
    $region40: #{rnn_forward.1} parent=1 // pred_region
      %66 = sst [smem:[#allocation12]] [#allocation17]
      %67 = sst [smem:[#allocation13]] [#allocation16]
    $region41: #{rnn_forward.1} parent=1 // pred_fallthru
      _
    %69 = shalt.err (0)
    %s71 = sshll.u32 [#allocation6], 4
    %s72 = int_to_ptr.vmem [resolvable:$true] %s71
    %74 = dma.hbm_to_vmem [thread:$0]  %s8, 20480, %s72, %s63
    %v75 = vld [vmem:[%s0] sm:$0xff]
    %v76 = vld [vmem:[%s0 + $0x8] sm:$0xff]
    %v77 = vld [vmem:[%s0 + $0x10] sm:$0xff]
    %v78 = vld [vmem:[%s0 + $0x18] sm:$0xff]
    %v79 = vld [vmem:[%s0 + $0x20] sm:$0xff]
    %v80 = vld [vmem:[%s0 + $0x28] sm:$0xff]
    %v81 = vld [vmem:[%s0 + $0x30] sm:$0xff]
    %v82 = vld [vmem:[%s0 + $0x38] sm:$0xff]
    %v83 = vld [vmem:[%s0 + $0x40] sm:$0xff]
    %v84 = vld [vmem:[%s0 + $0x48] sm:$0xff]
    %v85 = vld [vmem:[%s1] sm:$0xff]
    %v86 = vld [vmem:[%s1 + $0x8] sm:$0xff]
    %v87 = vld [vmem:[%s1 + $0x10] sm:$0xff]
    %v88 = vld [vmem:[%s1 + $0x18] sm:$0xff]
    %v89 = vld [vmem:[%s1 + $0x20] sm:$0xff]
    %v90 = vld [vmem:[%s1 + $0x28] sm:$0xff]
    %v91 = vld [vmem:[%s1 + $0x30] sm:$0xff]
    %v92 = vld [vmem:[%s1 + $0x38] sm:$0xff]
    %v93 = vld [vmem:[%s1 + $0x40] sm:$0xff]
    %v94 = vld [vmem:[%s1 + $0x48] sm:$0xff]
    %v95 = vld [vmem:[%s1 + $0x50] sm:$0xff]
    %v96 = vld [vmem:[%s1 + $0x58] sm:$0xff]
    %v97 = vld [vmem:[%s1 + $0x60] sm:$0xff]
    %v98 = vld [vmem:[%s1 + $0x68] sm:$0xff]
    %v99 = vld [vmem:[%s1 + $0x70] sm:$0xff]
    %v100 = vld [vmem:[%s1 + $0x78] sm:$0xff]
    %v101 = vld [vmem:[%s1 + $0x80] sm:$0xff]
    %v102 = vld [vmem:[%s1 + $0x88] sm:$0xff]
    %v103 = vld [vmem:[%s1 + $0x90] sm:$0xff]
    %v104 = vld [vmem:[%s1 + $0x98] sm:$0xff]
    %v105 = vld [vmem:[%s1 + $0xa0] sm:$0xff]
    %v106 = vld [vmem:[%s1 + $0xa8] sm:$0xff]
    %v107 = vld [vmem:[%s1 + $0xb0] sm:$0xff]
    %v108 = vld [vmem:[%s1 + $0xb8] sm:$0xff]
    %v109 = vld [vmem:[%s1 + $0xc0] sm:$0xff]
    %v110 = vld [vmem:[%s1 + $0xc8] sm:$0xff]
    %v111 = vld [vmem:[%s1 + $0xd0] sm:$0xff]
    %v112 = vld [vmem:[%s1 + $0xd8] sm:$0xff]
    %v113 = vld [vmem:[%s1 + $0xe0] sm:$0xff]
    %v114 = vld [vmem:[%s1 + $0xe8] sm:$0xff]
    %v115 = vld [vmem:[%s1 + $0xf0] sm:$0xff]
    %v116 = vld [vmem:[%s1 + $0xf8] sm:$0xff]
    %v117 = vld [vmem:[%s3] sm:$0x3]
    %v119 = vlaneseq
    %v120 = vshrl.u32 %v119, 7
    %v121 = vsub.s32 0, %v120
    %v122 = vrot.slane %v117, %v121
    %v123 = vlaneseq
    %v124 = vshrl.u32 %v123, 7
    %v125 = vsub.s32 1, %v124
    %v126 = vrot.slane %v117, %v125
    %129 = vmatprep.subr.mxu0 %v116
    %130 = vmatpush1.msra.mxu0 %v115
    %131 = vmatprep.subr.mxu0 %v114
    %132 = vmatpush1.msra.mxu0 %v113
    %133 = vmatprep.subr.mxu0 %v112
    %134 = vmatpush1.msra.mxu0 %v111
    %135 = vmatprep.subr.mxu0 %v110
    %136 = vmatpush1.msra.mxu0 %v109
    %137 = vmatprep.subr.mxu0 %v108
    %138 = vmatpush1.msra.mxu0 %v107
    %139 = vmatprep.subr.mxu0 %v106
    %140 = vmatpush1.msra.mxu0 %v105
    %141 = vmatprep.subr.mxu0 %v104
    %142 = vmatpush1.msra.mxu0 %v103
    %143 = vmatprep.subr.mxu0 %v102
    %144 = vmatpush1.msra.mxu0 %v101
    %145 = vmatprep.subr.mxu0 %v100
    %146 = vmatpush1.msra.mxu0 %v99
    %147 = vmatprep.subr.mxu0 %v98
    %148 = vmatpush1.msra.mxu0 %v97
    %149 = vmatprep.subr.mxu0 %v96
    %150 = vmatpush1.msra.mxu0 %v95
    %151 = vmatprep.subr.mxu0 %v94
    %152 = vmatpush1.msra.mxu0 %v93
    %153 = vmatprep.subr.mxu0 %v92
    %154 = vmatpush1.msra.mxu0 %v91
    %155 = vmatprep.subr.mxu0 %v90
    %156 = vmatpush1.msra.mxu0 %v89
    %157 = vmatprep.subr.mxu0 %v88
    %158 = vmatpush1.msra.mxu0 %v87
    %159 = vmatprep.subr.mxu0 %v86
    %160 = vmatpush1.msra.mxu0 %v85
    %161 = vmatprep.subr.mxu0 0.0
    %162 = vmatpush2.msra.mxu0 0.0
    %163 = vmatprep.subr.mxu0 0.0
    %164 = vmatpush2.msra.mxu0 0.0
    %165 = vmatprep.subr.mxu0 0.0
    %166 = vmatpush2.msra.mxu0 0.0
    %167 = vmatprep.subr.mxu0 0.0
    %168 = vmatpush2.msra.mxu0 0.0
    %169 = vmatprep.subr.mxu0 0.0
    %170 = vmatpush2.msra.mxu0 0.0
    %171 = vmatprep.subr.mxu0 0.0
    %172 = vmatpush2.msra.mxu0 0.0
    %173 = vmatprep.subr.mxu0 0.0
    %174 = vmatpush2.msra.mxu0 0.0
    %175 = vmatprep.subr.mxu0 0.0
    %176 = vmatpush2.msra.mxu0 0.0
    %177 = vmatprep.subr.mxu0 0.0
    %178 = vmatpush2.msra.mxu0 0.0
    %179 = vmatprep.subr.mxu0 0.0
    %180 = vmatpush2.msra.mxu0 0.0
    %181 = vmatprep.subr.mxu0 0.0
    %182 = vmatpush2.msra.mxu0 0.0
    %183 = vmatprep.subr.mxu0 0.0
    %184 = vmatpush2.msra.mxu0 0.0
    %185 = vmatprep.subr.mxu0 0.0
    %186 = vmatpush2.msra.mxu0 0.0
    %187 = vmatprep.subr.mxu0 0.0
    %188 = vmatpush2.msra.mxu0 0.0
    %189 = vmatprep.subr.mxu0 0.0
    %190 = vmatpush2.msra.mxu0 0.0
    %191 = vmatprep.subr.mxu0 0.0
    %192 = vmatpush2.msra.mxu0 0.0
    %193 = vmatprep.mubr.f32.mxu0 0.0
    %194 = vmatmul.mubr.f32.gmra.mxu0 %v75
    %v195 = vpop.f32.mrf.mxu0
    %v196 = vadd.f32 %v122, %v195
    %v197 = vpop.f32.mrf.mxu0
    %v198 = vadd.f32 %v126, %v197
    %199 = vmatprep.mubr.f32.mxu0 0.0
    %200 = vmatmul.mubr.f32.gmra.mxu0 %v76
    %v201 = vpop.f32.mrf.mxu0
    %v202 = vadd.f32 %v122, %v201
    %v203 = vpop.f32.mrf.mxu0
    %v204 = vadd.f32 %v126, %v203
    %205 = vmatprep.mubr.f32.mxu0 0.0
    %206 = vmatmul.mubr.f32.gmra.mxu0 %v77
    %v207 = vpop.f32.mrf.mxu0
    %v208 = vadd.f32 %v122, %v207
    %v209 = vpop.f32.mrf.mxu0
    %v210 = vadd.f32 %v126, %v209
    %211 = vmatprep.mubr.f32.mxu0 0.0
    %212 = vmatmul.mubr.f32.gmra.mxu0 %v78
    %v213 = vpop.f32.mrf.mxu0
    %v214 = vadd.f32 %v122, %v213
    %v215 = vpop.f32.mrf.mxu0
    %v216 = vadd.f32 %v126, %v215
    %217 = vmatprep.mubr.f32.mxu0 0.0
    %218 = vmatmul.mubr.f32.gmra.mxu0 %v79
    %v219 = vpop.f32.mrf.mxu0
    %v220 = vadd.f32 %v122, %v219
    %v221 = vpop.f32.mrf.mxu0
    %v222 = vadd.f32 %v126, %v221
    %223 = vmatprep.mubr.f32.mxu0 0.0
    %224 = vmatmul.mubr.f32.gmra.mxu0 %v80
    %v225 = vpop.f32.mrf.mxu0
    %v226 = vadd.f32 %v122, %v225
    %v227 = vpop.f32.mrf.mxu0
    %v228 = vadd.f32 %v126, %v227
    %229 = vmatprep.mubr.f32.mxu0 0.0
    %230 = vmatmul.mubr.f32.gmra.mxu0 %v81
    %v231 = vpop.f32.mrf.mxu0
    %v232 = vadd.f32 %v122, %v231
    %v233 = vpop.f32.mrf.mxu0
    %v234 = vadd.f32 %v126, %v233
    %235 = vmatprep.mubr.f32.mxu0 0.0
    %236 = vmatmul.mubr.f32.gmra.mxu0 %v82
    %v237 = vpop.f32.mrf.mxu0
    %v238 = vadd.f32 %v122, %v237
    %v239 = vpop.f32.mrf.mxu0
    %v240 = vadd.f32 %v126, %v239
    %241 = vmatprep.mubr.f32.mxu0 0.0
    %242 = vmatmul.mubr.f32.gmra.mxu0 %v83
    %v243 = vpop.f32.mrf.mxu0
    %v244 = vadd.f32 %v122, %v243
    %v245 = vpop.f32.mrf.mxu0
    %v246 = vadd.f32 %v126, %v245
    %247 = vmatprep.mubr.f32.mxu0 0.0
    %248 = vmatmul.mubr.f32.gmra.mxu0 %v84
    %v249 = vpop.f32.mrf.mxu0
    %v250 = vadd.f32 %v122, %v249
    %v251 = vpop.f32.mrf.mxu0
    %v252 = vadd.f32 %v126, %v251
    %253 = vdwg.mxu0
    %254 = vst [vmem:[#allocation2] sm:$0xff] %v196
    %255 = vst [vmem:[#allocation2 + $0x8] sm:$0xff] %v198
    %256 = vst [vmem:[#allocation2 + $0x10] sm:$0xff] %v202
    %257 = vst [vmem:[#allocation2 + $0x18] sm:$0xff] %v204
    %258 = vst [vmem:[#allocation2 + $0x20] sm:$0xff] %v208
    %259 = vst [vmem:[#allocation2 + $0x28] sm:$0xff] %v210
    %260 = vst [vmem:[#allocation2 + $0x30] sm:$0xff] %v214
    %261 = vst [vmem:[#allocation2 + $0x38] sm:$0xff] %v216
    %262 = vst [vmem:[#allocation2 + $0x40] sm:$0xff] %v220
    %263 = vst [vmem:[#allocation2 + $0x48] sm:$0xff] %v222
    %264 = vst [vmem:[#allocation2 + $0x50] sm:$0xff] %v226
    %265 = vst [vmem:[#allocation2 + $0x58] sm:$0xff] %v228
    %266 = vst [vmem:[#allocation2 + $0x60] sm:$0xff] %v232
    %267 = vst [vmem:[#allocation2 + $0x68] sm:$0xff] %v234
    %268 = vst [vmem:[#allocation2 + $0x70] sm:$0xff] %v238
    %269 = vst [vmem:[#allocation2 + $0x78] sm:$0xff] %v240
    %270 = vst [vmem:[#allocation2 + $0x80] sm:$0xff] %v244
    %271 = vst [vmem:[#allocation2 + $0x88] sm:$0xff] %v246
    %272 = vst [vmem:[#allocation2 + $0x90] sm:$0xff] %v250
    %273 = vst [vmem:[#allocation2 + $0x98] sm:$0xff] %v252
    %v274 = vld [vmem:[#allocation8] sm:$0xff]
    %v275 = vld [vmem:[#allocation8 + $0x8] sm:$0xff]
    %v276 = vld [vmem:[#allocation8 + $0x10] sm:$0xff]
    %v277 = vld [vmem:[#allocation8 + $0x18] sm:$0xff]
    %v278 = vld [vmem:[#allocation8 + $0x20] sm:$0xff]
    %v279 = vld [vmem:[#allocation8 + $0x28] sm:$0xff]
    %v280 = vld [vmem:[#allocation8 + $0x30] sm:$0xff]
    %v281 = vld [vmem:[#allocation8 + $0x38] sm:$0xff]
    %v282 = vld [vmem:[#allocation8 + $0x40] sm:$0xff]
    %v283 = vld [vmem:[#allocation8 + $0x48] sm:$0xff]
    %v284 = vld [vmem:[#allocation8 + $0x50] sm:$0xff]
    %v285 = vld [vmem:[#allocation8 + $0x58] sm:$0xff]
    %v286 = vld [vmem:[#allocation8 + $0x60] sm:$0xff]
    %v287 = vld [vmem:[#allocation8 + $0x68] sm:$0xff]
    %v288 = vld [vmem:[#allocation8 + $0x70] sm:$0xff]
    %v289 = vld [vmem:[#allocation8 + $0x78] sm:$0xff]
    %v290 = vld [vmem:[#allocation8 + $0x80] sm:$0xff]
    %v291 = vld [vmem:[#allocation8 + $0x88] sm:$0xff]
    %v292 = vld [vmem:[#allocation8 + $0x90] sm:$0xff]
    %v293 = vld [vmem:[#allocation8 + $0x98] sm:$0xff]
    %v294 = vld [vmem:[#allocation8 + $0xa0] sm:$0xff]
    %v295 = vld [vmem:[#allocation8 + $0xa8] sm:$0xff]
    %v296 = vld [vmem:[#allocation8 + $0xb0] sm:$0xff]
    %v297 = vld [vmem:[#allocation8 + $0xb8] sm:$0xff]
    %v298 = vld [vmem:[#allocation8 + $0xc0] sm:$0xff]
    %v299 = vld [vmem:[#allocation8 + $0xc8] sm:$0xff]
    %v300 = vld [vmem:[#allocation8 + $0xd0] sm:$0xff]
    %v301 = vld [vmem:[#allocation8 + $0xd8] sm:$0xff]
    %v302 = vld [vmem:[#allocation8 + $0xe0] sm:$0xff]
    %v303 = vld [vmem:[#allocation8 + $0xe8] sm:$0xff]
    %v304 = vld [vmem:[#allocation8 + $0xf0] sm:$0xff]
    %v305 = vld [vmem:[#allocation8 + $0xf8] sm:$0xff]
    %v306 = vld [vmem:[#allocation8 + $0x100] sm:$0xff]
    %v307 = vld [vmem:[#allocation8 + $0x108] sm:$0xff]
    %v308 = vld [vmem:[#allocation8 + $0x110] sm:$0xff]
    %v309 = vld [vmem:[#allocation8 + $0x118] sm:$0xff]
    %v310 = vld [vmem:[#allocation8 + $0x120] sm:$0xff]
    %v311 = vld [vmem:[#allocation8 + $0x128] sm:$0xff]
    %v312 = vld [vmem:[#allocation8 + $0x130] sm:$0xff]
    %v313 = vld [vmem:[#allocation8 + $0x138] sm:$0xff]
    %v314 = vld [vmem:[#allocation8 + $0x140] sm:$0xff]
    %v315 = vld [vmem:[#allocation8 + $0x148] sm:$0xff]
    %v316 = vld [vmem:[#allocation8 + $0x150] sm:$0xff]
    %v317 = vld [vmem:[#allocation8 + $0x158] sm:$0xff]
    %v318 = vld [vmem:[#allocation8 + $0x160] sm:$0xff]
    %v319 = vld [vmem:[#allocation8 + $0x168] sm:$0xff]
    %v320 = vld [vmem:[#allocation8 + $0x170] sm:$0xff]
    %v321 = vld [vmem:[#allocation8 + $0x178] sm:$0xff]
    %v322 = vld [vmem:[#allocation8 + $0x180] sm:$0xff]
    %v323 = vld [vmem:[#allocation8 + $0x188] sm:$0xff]
    %v324 = vld [vmem:[#allocation8 + $0x190] sm:$0xff]
    %v325 = vld [vmem:[#allocation8 + $0x198] sm:$0xff]
    %v326 = vld [vmem:[#allocation8 + $0x1a0] sm:$0xff]
    %v327 = vld [vmem:[#allocation8 + $0x1a8] sm:$0xff]
    %v328 = vld [vmem:[#allocation8 + $0x1b0] sm:$0xff]
    %v329 = vld [vmem:[#allocation8 + $0x1b8] sm:$0xff]
    %v330 = vld [vmem:[#allocation8 + $0x1c0] sm:$0xff]
    %v331 = vld [vmem:[#allocation8 + $0x1c8] sm:$0xff]
    %v332 = vld [vmem:[#allocation8 + $0x1d0] sm:$0xff]
    %v333 = vld [vmem:[#allocation8 + $0x1d8] sm:$0xff]
    %v334 = vld [vmem:[#allocation8 + $0x1e0] sm:$0xff]
    %v335 = vld [vmem:[#allocation8 + $0x1e8] sm:$0xff]
    %v336 = vld [vmem:[#allocation8 + $0x1f0] sm:$0xff]
    %v337 = vld [vmem:[#allocation8 + $0x1f8] sm:$0xff]
    %v338 = vld [vmem:[#allocation2] sm:$0xff]
    %v339 = vld [vmem:[#allocation2 + $0x8] sm:$0xff]
    %v340 = vld [vmem:[#allocation2 + $0x10] sm:$0xff]
    %v341 = vld [vmem:[#allocation2 + $0x18] sm:$0xff]
    %v342 = vtanh.pop %v338
    %v343 = vtanh.pop %v339
    %v344 = vtanh.pop %v340
    %v345 = vtanh.pop %v341
    %346 = vst [vmem:[#allocation3] sm:$0xff] %v342
    %347 = vst [vmem:[#allocation3 + $0x8] sm:$0xff] %v343
    %348 = vst [vmem:[#allocation3 + $0x10] sm:$0xff] %v344
    %349 = vst [vmem:[#allocation3 + $0x18] sm:$0xff] %v345
    %s350 = scalar_lea.vmem [#allocation2], 32
    %v351 = vld [vmem:[%s350] sm:$0xff]
    %v352 = vld [vmem:[%s350 + $0x8] sm:$0xff]
    %v353 = vld [vmem:[%s350 + $0x10] sm:$0xff]
    %v354 = vld [vmem:[%s350 + $0x18] sm:$0xff]
    %355 = vmatprep.subr.mxu0 %v305
    %356 = vmatpush1.msra.mxu0 %v304
    %357 = vmatprep.subr.mxu0 %v303
    %358 = vmatpush1.msra.mxu0 %v302
    %359 = vmatprep.subr.mxu0 %v301
    %360 = vmatpush1.msra.mxu0 %v300
    %361 = vmatprep.subr.mxu0 %v299
    %362 = vmatpush1.msra.mxu0 %v298
    %363 = vmatprep.subr.mxu0 %v297
    %364 = vmatpush1.msra.mxu0 %v296
    %365 = vmatprep.subr.mxu0 %v295
    %366 = vmatpush1.msra.mxu0 %v294
    %367 = vmatprep.subr.mxu0 %v293
    %368 = vmatpush1.msra.mxu0 %v292
    %369 = vmatprep.subr.mxu0 %v291
    %370 = vmatpush1.msra.mxu0 %v290
    %371 = vmatprep.subr.mxu0 %v289
    %372 = vmatpush1.msra.mxu0 %v288
    %373 = vmatprep.subr.mxu0 %v287
    %374 = vmatpush1.msra.mxu0 %v286
    %375 = vmatprep.subr.mxu0 %v285
    %376 = vmatpush1.msra.mxu0 %v284
    %377 = vmatprep.subr.mxu0 %v283
    %378 = vmatpush1.msra.mxu0 %v282
    %379 = vmatprep.subr.mxu0 %v281
    %380 = vmatpush1.msra.mxu0 %v280
    %381 = vmatprep.subr.mxu0 %v279
    %382 = vmatpush1.msra.mxu0 %v278
    %383 = vmatprep.subr.mxu0 %v277
    %384 = vmatpush1.msra.mxu0 %v276
    %385 = vmatprep.subr.mxu0 %v275
    %386 = vmatpush1.msra.mxu0 %v274
    %387 = vmatprep.subr.mxu0 %v337
    %388 = vmatpush2.msra.mxu0 %v336
    %389 = vmatprep.subr.mxu0 %v335
    %390 = vmatpush2.msra.mxu0 %v334
    %391 = vmatprep.subr.mxu0 %v333
    %392 = vmatpush2.msra.mxu0 %v332
    %393 = vmatprep.subr.mxu0 %v331
    %394 = vmatpush2.msra.mxu0 %v330
    %395 = vmatprep.subr.mxu0 %v329
    %396 = vmatpush2.msra.mxu0 %v328
    %397 = vmatprep.subr.mxu0 %v327
    %398 = vmatpush2.msra.mxu0 %v326
    %399 = vmatprep.subr.mxu0 %v325
    %400 = vmatpush2.msra.mxu0 %v324
    %401 = vmatprep.subr.mxu0 %v323
    %402 = vmatpush2.msra.mxu0 %v322
    %403 = vmatprep.subr.mxu0 %v321
    %404 = vmatpush2.msra.mxu0 %v320
    %405 = vmatprep.subr.mxu0 %v319
    %406 = vmatpush2.msra.mxu0 %v318
    %407 = vmatprep.subr.mxu0 %v317
    %408 = vmatpush2.msra.mxu0 %v316
    %409 = vmatprep.subr.mxu0 %v315
    %410 = vmatpush2.msra.mxu0 %v314
    %411 = vmatprep.subr.mxu0 %v313
    %412 = vmatpush2.msra.mxu0 %v312
    %413 = vmatprep.subr.mxu0 %v311
    %414 = vmatpush2.msra.mxu0 %v310
    %415 = vmatprep.subr.mxu0 %v309
    %416 = vmatpush2.msra.mxu0 %v308
    %417 = vmatprep.subr.mxu0 %v307
    %418 = vmatpush2.msra.mxu0 %v306
    %419 = vmatprep.mubr.f32.mxu0 %v343
    %420 = vmatmul.mubr.f32.gmra.mxu0 %v342
    %v421 = vpop.f32.mrf.mxu0
    %v422 = vadd.f32 0.0, %v421
    %v423 = vpop.f32.mrf.mxu0
    %v424 = vadd.f32 0.0, %v423
    %425 = vmatprep.mubr.f32.mxu0 %v345
    %426 = vmatmul.mubr.f32.gmra.mxu0 %v344
    %v427 = vpop.f32.mrf.mxu0
    %v428 = vadd.f32 0.0, %v427
    %v429 = vpop.f32.mrf.mxu0
    %v430 = vadd.f32 0.0, %v429
    %431 = vdwg.mxu0
    %v432 = vadd.f32 %v351, %v422
    %v433 = vadd.f32 %v352, %v424
    %v434 = vadd.f32 %v353, %v428
    %v435 = vadd.f32 %v354, %v430
    %v436 = vtanh.pop %v432
    %v437 = vtanh.pop %v433
    %v438 = vtanh.pop %v434
    %v439 = vtanh.pop %v435
    %s440 = scalar_lea.vmem [#allocation3], 32
    %441 = vst [vmem:[%s440] sm:$0xff] %v436
    %442 = vst [vmem:[%s440 + $0x8] sm:$0xff] %v437
    %443 = vst [vmem:[%s440 + $0x10] sm:$0xff] %v438
    %444 = vst [vmem:[%s440 + $0x18] sm:$0xff] %v439
    %s445 = scalar_lea.vmem [#allocation2], 64
    %v446 = vld [vmem:[%s445] sm:$0xff]
    %v447 = vld [vmem:[%s445 + $0x8] sm:$0xff]
    %v448 = vld [vmem:[%s445 + $0x10] sm:$0xff]
    %v449 = vld [vmem:[%s445 + $0x18] sm:$0xff]
    %450 = vmatprep.subr.mxu0 %v305
    %451 = vmatpush1.msra.mxu0 %v304
    %452 = vmatprep.subr.mxu0 %v303
    %453 = vmatpush1.msra.mxu0 %v302
    %454 = vmatprep.subr.mxu0 %v301
    %455 = vmatpush1.msra.mxu0 %v300
    %456 = vmatprep.subr.mxu0 %v299
    %457 = vmatpush1.msra.mxu0 %v298
    %458 = vmatprep.subr.mxu0 %v297
    %459 = vmatpush1.msra.mxu0 %v296
    %460 = vmatprep.subr.mxu0 %v295
    %461 = vmatpush1.msra.mxu0 %v294
    %462 = vmatprep.subr.mxu0 %v293
    %463 = vmatpush1.msra.mxu0 %v292
    %464 = vmatprep.subr.mxu0 %v291
    %465 = vmatpush1.msra.mxu0 %v290
    %466 = vmatprep.subr.mxu0 %v289
    %467 = vmatpush1.msra.mxu0 %v288
    %468 = vmatprep.subr.mxu0 %v287
    %469 = vmatpush1.msra.mxu0 %v286
    %470 = vmatprep.subr.mxu0 %v285
    %471 = vmatpush1.msra.mxu0 %v284
    %472 = vmatprep.subr.mxu0 %v283
    %473 = vmatpush1.msra.mxu0 %v282
    %474 = vmatprep.subr.mxu0 %v281
    %475 = vmatpush1.msra.mxu0 %v280
    %476 = vmatprep.subr.mxu0 %v279
    %477 = vmatpush1.msra.mxu0 %v278
    %478 = vmatprep.subr.mxu0 %v277
    %479 = vmatpush1.msra.mxu0 %v276
    %480 = vmatprep.subr.mxu0 %v275
    %481 = vmatpush1.msra.mxu0 %v274
    %482 = vmatprep.subr.mxu0 %v337
    %483 = vmatpush2.msra.mxu0 %v336
    %484 = vmatprep.subr.mxu0 %v335
    %485 = vmatpush2.msra.mxu0 %v334
    %486 = vmatprep.subr.mxu0 %v333
    %487 = vmatpush2.msra.mxu0 %v332
    %488 = vmatprep.subr.mxu0 %v331
    %489 = vmatpush2.msra.mxu0 %v330
    %490 = vmatprep.subr.mxu0 %v329
    %491 = vmatpush2.msra.mxu0 %v328
    %492 = vmatprep.subr.mxu0 %v327
    %493 = vmatpush2.msra.mxu0 %v326
    %494 = vmatprep.subr.mxu0 %v325
    %495 = vmatpush2.msra.mxu0 %v324
    %496 = vmatprep.subr.mxu0 %v323
    %497 = vmatpush2.msra.mxu0 %v322
    %498 = vmatprep.subr.mxu0 %v321
    %499 = vmatpush2.msra.mxu0 %v320
    %500 = vmatprep.subr.mxu0 %v319
    %501 = vmatpush2.msra.mxu0 %v318
    %502 = vmatprep.subr.mxu0 %v317
    %503 = vmatpush2.msra.mxu0 %v316
    %504 = vmatprep.subr.mxu0 %v315
    %505 = vmatpush2.msra.mxu0 %v314
    %506 = vmatprep.subr.mxu0 %v313
    %507 = vmatpush2.msra.mxu0 %v312
    %508 = vmatprep.subr.mxu0 %v311
    %509 = vmatpush2.msra.mxu0 %v310
    %510 = vmatprep.subr.mxu0 %v309
    %511 = vmatpush2.msra.mxu0 %v308
    %512 = vmatprep.subr.mxu0 %v307
    %513 = vmatpush2.msra.mxu0 %v306
    %514 = vmatprep.mubr.f32.mxu0 %v437
    %515 = vmatmul.mubr.f32.gmra.mxu0 %v436
    %v516 = vpop.f32.mrf.mxu0
    %v517 = vadd.f32 0.0, %v516
    %v518 = vpop.f32.mrf.mxu0
    %v519 = vadd.f32 0.0, %v518
    %520 = vmatprep.mubr.f32.mxu0 %v439
    %521 = vmatmul.mubr.f32.gmra.mxu0 %v438
    %v522 = vpop.f32.mrf.mxu0
    %v523 = vadd.f32 0.0, %v522
    %v524 = vpop.f32.mrf.mxu0
    %v525 = vadd.f32 0.0, %v524
    %526 = vdwg.mxu0
    %v527 = vadd.f32 %v446, %v517
    %v528 = vadd.f32 %v447, %v519
    %v529 = vadd.f32 %v448, %v523
    %v530 = vadd.f32 %v449, %v525
    %v531 = vtanh.pop %v527
    %v532 = vtanh.pop %v528
    %v533 = vtanh.pop %v529
    %v534 = vtanh.pop %v530
    %s535 = scalar_lea.vmem [#allocation3], 64
    %536 = vst [vmem:[%s535] sm:$0xff] %v531
    %537 = vst [vmem:[%s535 + $0x8] sm:$0xff] %v532
    %538 = vst [vmem:[%s535 + $0x10] sm:$0xff] %v533
    %539 = vst [vmem:[%s535 + $0x18] sm:$0xff] %v534
    %s540 = scalar_lea.vmem [#allocation2], 96
    %v541 = vld [vmem:[%s540] sm:$0xff]
    %v542 = vld [vmem:[%s540 + $0x8] sm:$0xff]
    %v543 = vld [vmem:[%s540 + $0x10] sm:$0xff]
    %v544 = vld [vmem:[%s540 + $0x18] sm:$0xff]
    %545 = vmatprep.subr.mxu0 %v305
    %546 = vmatpush1.msra.mxu0 %v304
    %547 = vmatprep.subr.mxu0 %v303
    %548 = vmatpush1.msra.mxu0 %v302
    %549 = vmatprep.subr.mxu0 %v301
    %550 = vmatpush1.msra.mxu0 %v300
    %551 = vmatprep.subr.mxu0 %v299
    %552 = vmatpush1.msra.mxu0 %v298
    %553 = vmatprep.subr.mxu0 %v297
    %554 = vmatpush1.msra.mxu0 %v296
    %555 = vmatprep.subr.mxu0 %v295
    %556 = vmatpush1.msra.mxu0 %v294
    %557 = vmatprep.subr.mxu0 %v293
    %558 = vmatpush1.msra.mxu0 %v292
    %559 = vmatprep.subr.mxu0 %v291
    %560 = vmatpush1.msra.mxu0 %v290
    %561 = vmatprep.subr.mxu0 %v289
    %562 = vmatpush1.msra.mxu0 %v288
    %563 = vmatprep.subr.mxu0 %v287
    %564 = vmatpush1.msra.mxu0 %v286
    %565 = vmatprep.subr.mxu0 %v285
    %566 = vmatpush1.msra.mxu0 %v284
    %567 = vmatprep.subr.mxu0 %v283
    %568 = vmatpush1.msra.mxu0 %v282
    %569 = vmatprep.subr.mxu0 %v281
    %570 = vmatpush1.msra.mxu0 %v280
    %571 = vmatprep.subr.mxu0 %v279
    %572 = vmatpush1.msra.mxu0 %v278
    %573 = vmatprep.subr.mxu0 %v277
    %574 = vmatpush1.msra.mxu0 %v276
    %575 = vmatprep.subr.mxu0 %v275
    %576 = vmatpush1.msra.mxu0 %v274
    %577 = vmatprep.subr.mxu0 %v337
    %578 = vmatpush2.msra.mxu0 %v336
    %579 = vmatprep.subr.mxu0 %v335
    %580 = vmatpush2.msra.mxu0 %v334
    %581 = vmatprep.subr.mxu0 %v333
    %582 = vmatpush2.msra.mxu0 %v332
    %583 = vmatprep.subr.mxu0 %v331
    %584 = vmatpush2.msra.mxu0 %v330
    %585 = vmatprep.subr.mxu0 %v329
    %586 = vmatpush2.msra.mxu0 %v328
    %587 = vmatprep.subr.mxu0 %v327
    %588 = vmatpush2.msra.mxu0 %v326
    %589 = vmatprep.subr.mxu0 %v325
    %590 = vmatpush2.msra.mxu0 %v324
    %591 = vmatprep.subr.mxu0 %v323
    %592 = vmatpush2.msra.mxu0 %v322
    %593 = vmatprep.subr.mxu0 %v321
    %594 = vmatpush2.msra.mxu0 %v320
    %595 = vmatprep.subr.mxu0 %v319
    %596 = vmatpush2.msra.mxu0 %v318
    %597 = vmatprep.subr.mxu0 %v317
    %598 = vmatpush2.msra.mxu0 %v316
    %599 = vmatprep.subr.mxu0 %v315
    %600 = vmatpush2.msra.mxu0 %v314
    %601 = vmatprep.subr.mxu0 %v313
    %602 = vmatpush2.msra.mxu0 %v312
    %603 = vmatprep.subr.mxu0 %v311
    %604 = vmatpush2.msra.mxu0 %v310
    %605 = vmatprep.subr.mxu0 %v309
    %606 = vmatpush2.msra.mxu0 %v308
    %607 = vmatprep.subr.mxu0 %v307
    %608 = vmatpush2.msra.mxu0 %v306
    %609 = vmatprep.mubr.f32.mxu0 %v532
    %610 = vmatmul.mubr.f32.gmra.mxu0 %v531
    %v611 = vpop.f32.mrf.mxu0
    %v612 = vadd.f32 0.0, %v611
    %v613 = vpop.f32.mrf.mxu0
    %v614 = vadd.f32 0.0, %v613
    %615 = vmatprep.mubr.f32.mxu0 %v534
    %616 = vmatmul.mubr.f32.gmra.mxu0 %v533
    %v617 = vpop.f32.mrf.mxu0
    %v618 = vadd.f32 0.0, %v617
    %v619 = vpop.f32.mrf.mxu0
    %v620 = vadd.f32 0.0, %v619
    %621 = vdwg.mxu0
    %v622 = vadd.f32 %v541, %v612
    %v623 = vadd.f32 %v542, %v614
    %v624 = vadd.f32 %v543, %v618
    %v625 = vadd.f32 %v544, %v620
    %v626 = vtanh.pop %v622
    %v627 = vtanh.pop %v623
    %v628 = vtanh.pop %v624
    %v629 = vtanh.pop %v625
    %s630 = scalar_lea.vmem [#allocation3], 96
    %631 = vst [vmem:[%s630] sm:$0xff] %v626
    %632 = vst [vmem:[%s630 + $0x8] sm:$0xff] %v627
    %633 = vst [vmem:[%s630 + $0x10] sm:$0xff] %v628
    %634 = vst [vmem:[%s630 + $0x18] sm:$0xff] %v629
    %s635 = scalar_lea.vmem [#allocation2], 128
    %v636 = vld [vmem:[%s635] sm:$0xff]
    %v637 = vld [vmem:[%s635 + $0x8] sm:$0xff]
    %v638 = vld [vmem:[%s635 + $0x10] sm:$0xff]
    %v639 = vld [vmem:[%s635 + $0x18] sm:$0xff]
    %640 = vmatprep.subr.mxu0 %v305
    %641 = vmatpush1.msra.mxu0 %v304
    %642 = vmatprep.subr.mxu0 %v303
    %643 = vmatpush1.msra.mxu0 %v302
    %644 = vmatprep.subr.mxu0 %v301
    %645 = vmatpush1.msra.mxu0 %v300
    %646 = vmatprep.subr.mxu0 %v299
    %647 = vmatpush1.msra.mxu0 %v298
    %648 = vmatprep.subr.mxu0 %v297
    %649 = vmatpush1.msra.mxu0 %v296
    %650 = vmatprep.subr.mxu0 %v295
    %651 = vmatpush1.msra.mxu0 %v294
    %652 = vmatprep.subr.mxu0 %v293
    %653 = vmatpush1.msra.mxu0 %v292
    %654 = vmatprep.subr.mxu0 %v291
    %655 = vmatpush1.msra.mxu0 %v290
    %656 = vmatprep.subr.mxu0 %v289
    %657 = vmatpush1.msra.mxu0 %v288
    %658 = vmatprep.subr.mxu0 %v287
    %659 = vmatpush1.msra.mxu0 %v286
    %660 = vmatprep.subr.mxu0 %v285
    %661 = vmatpush1.msra.mxu0 %v284
    %662 = vmatprep.subr.mxu0 %v283
    %663 = vmatpush1.msra.mxu0 %v282
    %664 = vmatprep.subr.mxu0 %v281
    %665 = vmatpush1.msra.mxu0 %v280
    %666 = vmatprep.subr.mxu0 %v279
    %667 = vmatpush1.msra.mxu0 %v278
    %668 = vmatprep.subr.mxu0 %v277
    %669 = vmatpush1.msra.mxu0 %v276
    %670 = vmatprep.subr.mxu0 %v275
    %671 = vmatpush1.msra.mxu0 %v274
    %672 = vmatprep.subr.mxu0 %v337
    %673 = vmatpush2.msra.mxu0 %v336
    %674 = vmatprep.subr.mxu0 %v335
    %675 = vmatpush2.msra.mxu0 %v334
    %676 = vmatprep.subr.mxu0 %v333
    %677 = vmatpush2.msra.mxu0 %v332
    %678 = vmatprep.subr.mxu0 %v331
    %679 = vmatpush2.msra.mxu0 %v330
    %680 = vmatprep.subr.mxu0 %v329
    %681 = vmatpush2.msra.mxu0 %v328
    %682 = vmatprep.subr.mxu0 %v327
    %683 = vmatpush2.msra.mxu0 %v326
    %684 = vmatprep.subr.mxu0 %v325
    %685 = vmatpush2.msra.mxu0 %v324
    %686 = vmatprep.subr.mxu0 %v323
    %687 = vmatpush2.msra.mxu0 %v322
    %688 = vmatprep.subr.mxu0 %v321
    %689 = vmatpush2.msra.mxu0 %v320
    %690 = vmatprep.subr.mxu0 %v319
    %691 = vmatpush2.msra.mxu0 %v318
    %692 = vmatprep.subr.mxu0 %v317
    %693 = vmatpush2.msra.mxu0 %v316
    %694 = vmatprep.subr.mxu0 %v315
    %695 = vmatpush2.msra.mxu0 %v314
    %696 = vmatprep.subr.mxu0 %v313
    %697 = vmatpush2.msra.mxu0 %v312
    %698 = vmatprep.subr.mxu0 %v311
    %699 = vmatpush2.msra.mxu0 %v310
    %700 = vmatprep.subr.mxu0 %v309
    %701 = vmatpush2.msra.mxu0 %v308
    %702 = vmatprep.subr.mxu0 %v307
    %703 = vmatpush2.msra.mxu0 %v306
    %704 = vmatprep.mubr.f32.mxu0 %v627
    %705 = vmatmul.mubr.f32.gmra.mxu0 %v626
    %v706 = vpop.f32.mrf.mxu0
    %v707 = vadd.f32 0.0, %v706
    %v708 = vpop.f32.mrf.mxu0
    %v709 = vadd.f32 0.0, %v708
    %710 = vmatprep.mubr.f32.mxu0 %v629
    %711 = vmatmul.mubr.f32.gmra.mxu0 %v628
    %v712 = vpop.f32.mrf.mxu0
    %v713 = vadd.f32 0.0, %v712
    %v714 = vpop.f32.mrf.mxu0
    %v715 = vadd.f32 0.0, %v714
    %716 = vdwg.mxu0
    %v717 = vadd.f32 %v636, %v707
    %v718 = vadd.f32 %v637, %v709
    %v719 = vadd.f32 %v638, %v713
    %v720 = vadd.f32 %v639, %v715
    %v721 = vtanh.pop %v717
    %v722 = vtanh.pop %v718
    %v723 = vtanh.pop %v719
    %v724 = vtanh.pop %v720
    %s725 = scalar_lea.vmem [#allocation3], 128
    %726 = vst [vmem:[%s725] sm:$0xff] %v721
    %727 = vst [vmem:[%s725 + $0x8] sm:$0xff] %v722
    %728 = vst [vmem:[%s725 + $0x10] sm:$0xff] %v723
    %729 = vst [vmem:[%s725 + $0x18] sm:$0xff] %v724
    %s730 = smul.u32 8, 32
    %s731 = smul.u32 %s730, 2
    %s732 = sshll.u32 %s731, 4
    %733 = dma.done [#allocation7], %s732
    %v734 = vld [vmem:[#allocation3] sm:$0xff]
    %v735 = vld [vmem:[#allocation3 + $0x8] sm:$0xff]
    %v736 = vld [vmem:[#allocation3 + $0x10] sm:$0xff]
    %v737 = vld [vmem:[#allocation3 + $0x18] sm:$0xff]
    %v738 = vld [vmem:[#allocation3 + $0x20] sm:$0xff]
    %v739 = vld [vmem:[#allocation3 + $0x28] sm:$0xff]
    %v740 = vld [vmem:[#allocation3 + $0x30] sm:$0xff]
    %v741 = vld [vmem:[#allocation3 + $0x38] sm:$0xff]
    %v742 = vld [vmem:[#allocation3 + $0x40] sm:$0xff]
    %v743 = vld [vmem:[#allocation3 + $0x48] sm:$0xff]
    %v744 = vld [vmem:[#allocation3 + $0x50] sm:$0xff]
    %v745 = vld [vmem:[#allocation3 + $0x58] sm:$0xff]
    %v746 = vld [vmem:[#allocation3 + $0x60] sm:$0xff]
    %v747 = vld [vmem:[#allocation3 + $0x68] sm:$0xff]
    %v748 = vld [vmem:[#allocation3 + $0x70] sm:$0xff]
    %v749 = vld [vmem:[#allocation3 + $0x78] sm:$0xff]
    %v750 = vld [vmem:[#allocation3 + $0x80] sm:$0xff]
    %v751 = vld [vmem:[#allocation3 + $0x88] sm:$0xff]
    %v752 = vld [vmem:[#allocation3 + $0x90] sm:$0xff]
    %v753 = vld [vmem:[#allocation3 + $0x98] sm:$0xff]
    %v754 = vld [vmem:[#allocation4] sm:$0xff]
    %v755 = vld [vmem:[#allocation4 + $0x8] sm:$0xff]
    %v756 = vld [vmem:[#allocation4 + $0x10] sm:$0xff]
    %v757 = vld [vmem:[#allocation4 + $0x18] sm:$0xff]
    %v758 = vld [vmem:[#allocation4 + $0x20] sm:$0xff]
    %v759 = vld [vmem:[#allocation4 + $0x28] sm:$0xff]
    %v760 = vld [vmem:[#allocation4 + $0x30] sm:$0xff]
    %v761 = vld [vmem:[#allocation4 + $0x38] sm:$0xff]
    %v762 = vld [vmem:[#allocation4 + $0x40] sm:$0xff]
    %v763 = vld [vmem:[#allocation4 + $0x48] sm:$0xff]
    %v764 = vld [vmem:[#allocation4 + $0x50] sm:$0xff]
    %v765 = vld [vmem:[#allocation4 + $0x58] sm:$0xff]
    %v766 = vld [vmem:[#allocation4 + $0x60] sm:$0xff]
    %v767 = vld [vmem:[#allocation4 + $0x68] sm:$0xff]
    %v768 = vld [vmem:[#allocation4 + $0x70] sm:$0xff]
    %v769 = vld [vmem:[#allocation4 + $0x78] sm:$0xff]
    %v770 = vld [vmem:[#allocation4 + $0x80] sm:$0xff]
    %v771 = vld [vmem:[#allocation4 + $0x88] sm:$0xff]
    %v772 = vld [vmem:[#allocation4 + $0x90] sm:$0xff]
    %v773 = vld [vmem:[#allocation4 + $0x98] sm:$0xff]
    %v774 = vld [vmem:[#allocation4 + $0xa0] sm:$0xff]
    %v775 = vld [vmem:[#allocation4 + $0xa8] sm:$0xff]
    %v776 = vld [vmem:[#allocation4 + $0xb0] sm:$0xff]
    %v777 = vld [vmem:[#allocation4 + $0xb8] sm:$0xff]
    %v778 = vld [vmem:[#allocation4 + $0xc0] sm:$0xff]
    %v779 = vld [vmem:[#allocation4 + $0xc8] sm:$0xff]
    %v780 = vld [vmem:[#allocation4 + $0xd0] sm:$0xff]
    %v781 = vld [vmem:[#allocation4 + $0xd8] sm:$0xff]
    %v782 = vld [vmem:[#allocation4 + $0xe0] sm:$0xff]
    %v783 = vld [vmem:[#allocation4 + $0xe8] sm:$0xff]
    %v784 = vld [vmem:[#allocation4 + $0xf0] sm:$0xff]
    %v785 = vld [vmem:[#allocation4 + $0xf8] sm:$0xff]
    %v786 = vld [vmem:[#allocation4 + $0x100] sm:$0xff]
    %v787 = vld [vmem:[#allocation4 + $0x108] sm:$0xff]
    %v788 = vld [vmem:[#allocation4 + $0x110] sm:$0xff]
    %v789 = vld [vmem:[#allocation4 + $0x118] sm:$0xff]
    %v790 = vld [vmem:[#allocation4 + $0x120] sm:$0xff]
    %v791 = vld [vmem:[#allocation4 + $0x128] sm:$0xff]
    %v792 = vld [vmem:[#allocation4 + $0x130] sm:$0xff]
    %v793 = vld [vmem:[#allocation4 + $0x138] sm:$0xff]
    %v794 = vld [vmem:[#allocation4 + $0x140] sm:$0xff]
    %v795 = vld [vmem:[#allocation4 + $0x148] sm:$0xff]
    %v796 = vld [vmem:[#allocation4 + $0x150] sm:$0xff]
    %v797 = vld [vmem:[#allocation4 + $0x158] sm:$0xff]
    %v798 = vld [vmem:[#allocation4 + $0x160] sm:$0xff]
    %v799 = vld [vmem:[#allocation4 + $0x168] sm:$0xff]
    %v800 = vld [vmem:[#allocation4 + $0x170] sm:$0xff]
    %v801 = vld [vmem:[#allocation4 + $0x178] sm:$0xff]
    %v802 = vld [vmem:[#allocation4 + $0x180] sm:$0xff]
    %v803 = vld [vmem:[#allocation4 + $0x188] sm:$0xff]
    %v804 = vld [vmem:[#allocation4 + $0x190] sm:$0xff]
    %v805 = vld [vmem:[#allocation4 + $0x198] sm:$0xff]
    %v806 = vld [vmem:[#allocation4 + $0x1a0] sm:$0xff]
    %v807 = vld [vmem:[#allocation4 + $0x1a8] sm:$0xff]
    %v808 = vld [vmem:[#allocation4 + $0x1b0] sm:$0xff]
    %v809 = vld [vmem:[#allocation4 + $0x1b8] sm:$0xff]
    %v810 = vld [vmem:[#allocation4 + $0x1c0] sm:$0xff]
    %v811 = vld [vmem:[#allocation4 + $0x1c8] sm:$0xff]
    %v812 = vld [vmem:[#allocation4 + $0x1d0] sm:$0xff]
    %v813 = vld [vmem:[#allocation4 + $0x1d8] sm:$0xff]
    %v814 = vld [vmem:[#allocation4 + $0x1e0] sm:$0xff]
    %v815 = vld [vmem:[#allocation4 + $0x1e8] sm:$0xff]
    %v816 = vld [vmem:[#allocation4 + $0x1f0] sm:$0xff]
    %v817 = vld [vmem:[#allocation4 + $0x1f8] sm:$0xff]
    %v818 = vld [vmem:[%s4] sm:$0x3]
    %v820 = vlaneseq
    %v821 = vshrl.u32 %v820, 7
    %v822 = vsub.s32 0, %v821
    %v823 = vrot.slane %v818, %v822
    %v824 = vlaneseq
    %v825 = vshrl.u32 %v824, 7
    %v826 = vsub.s32 1, %v825
    %v827 = vrot.slane %v818, %v826
    %830 = vmatprep.subr.mxu0 %v785
    %831 = vmatpush1.msra.mxu0 %v784
    %832 = vmatprep.subr.mxu0 %v783
    %833 = vmatpush1.msra.mxu0 %v782
    %834 = vmatprep.subr.mxu0 %v781
    %835 = vmatpush1.msra.mxu0 %v780
    %836 = vmatprep.subr.mxu0 %v779
    %837 = vmatpush1.msra.mxu0 %v778
    %838 = vmatprep.subr.mxu0 %v777
    %839 = vmatpush1.msra.mxu0 %v776
    %840 = vmatprep.subr.mxu0 %v775
    %841 = vmatpush1.msra.mxu0 %v774
    %842 = vmatprep.subr.mxu0 %v773
    %843 = vmatpush1.msra.mxu0 %v772
    %844 = vmatprep.subr.mxu0 %v771
    %845 = vmatpush1.msra.mxu0 %v770
    %846 = vmatprep.subr.mxu0 %v769
    %847 = vmatpush1.msra.mxu0 %v768
    %848 = vmatprep.subr.mxu0 %v767
    %849 = vmatpush1.msra.mxu0 %v766
    %850 = vmatprep.subr.mxu0 %v765
    %851 = vmatpush1.msra.mxu0 %v764
    %852 = vmatprep.subr.mxu0 %v763
    %853 = vmatpush1.msra.mxu0 %v762
    %854 = vmatprep.subr.mxu0 %v761
    %855 = vmatpush1.msra.mxu0 %v760
    %856 = vmatprep.subr.mxu0 %v759
    %857 = vmatpush1.msra.mxu0 %v758
    %858 = vmatprep.subr.mxu0 %v757
    %859 = vmatpush1.msra.mxu0 %v756
    %860 = vmatprep.subr.mxu0 %v755
    %861 = vmatpush1.msra.mxu0 %v754
    %862 = vmatprep.subr.mxu0 %v817
    %863 = vmatpush2.msra.mxu0 %v816
    %864 = vmatprep.subr.mxu0 %v815
    %865 = vmatpush2.msra.mxu0 %v814
    %866 = vmatprep.subr.mxu0 %v813
    %867 = vmatpush2.msra.mxu0 %v812
    %868 = vmatprep.subr.mxu0 %v811
    %869 = vmatpush2.msra.mxu0 %v810
    %870 = vmatprep.subr.mxu0 %v809
    %871 = vmatpush2.msra.mxu0 %v808
    %872 = vmatprep.subr.mxu0 %v807
    %873 = vmatpush2.msra.mxu0 %v806
    %874 = vmatprep.subr.mxu0 %v805
    %875 = vmatpush2.msra.mxu0 %v804
    %876 = vmatprep.subr.mxu0 %v803
    %877 = vmatpush2.msra.mxu0 %v802
    %878 = vmatprep.subr.mxu0 %v801
    %879 = vmatpush2.msra.mxu0 %v800
    %880 = vmatprep.subr.mxu0 %v799
    %881 = vmatpush2.msra.mxu0 %v798
    %882 = vmatprep.subr.mxu0 %v797
    %883 = vmatpush2.msra.mxu0 %v796
    %884 = vmatprep.subr.mxu0 %v795
    %885 = vmatpush2.msra.mxu0 %v794
    %886 = vmatprep.subr.mxu0 %v793
    %887 = vmatpush2.msra.mxu0 %v792
    %888 = vmatprep.subr.mxu0 %v791
    %889 = vmatpush2.msra.mxu0 %v790
    %890 = vmatprep.subr.mxu0 %v789
    %891 = vmatpush2.msra.mxu0 %v788
    %892 = vmatprep.subr.mxu0 %v787
    %893 = vmatpush2.msra.mxu0 %v786
    %894 = vmatprep.mubr.f32.mxu0 %v735
    %895 = vmatmul.mubr.f32.gmra.mxu0 %v734
    %v896 = vpop.f32.mrf.mxu0
    %v897 = vadd.f32 %v823, %v896
    %v898 = vpop.f32.mrf.mxu0
    %v899 = vadd.f32 %v827, %v898
    %900 = vmatprep.mubr.f32.mxu0 %v737
    %901 = vmatmul.mubr.f32.gmra.mxu0 %v736
    %v902 = vpop.f32.mrf.mxu0
    %v903 = vadd.f32 %v823, %v902
    %v904 = vpop.f32.mrf.mxu0
    %v905 = vadd.f32 %v827, %v904
    %906 = vmatprep.mubr.f32.mxu0 %v739
    %907 = vmatmul.mubr.f32.gmra.mxu0 %v738
    %v908 = vpop.f32.mrf.mxu0
    %v909 = vadd.f32 %v823, %v908
    %v910 = vpop.f32.mrf.mxu0
    %v911 = vadd.f32 %v827, %v910
    %912 = vmatprep.mubr.f32.mxu0 %v741
    %913 = vmatmul.mubr.f32.gmra.mxu0 %v740
    %v914 = vpop.f32.mrf.mxu0
    %v915 = vadd.f32 %v823, %v914
    %v916 = vpop.f32.mrf.mxu0
    %v917 = vadd.f32 %v827, %v916
    %918 = vmatprep.mubr.f32.mxu0 %v743
    %919 = vmatmul.mubr.f32.gmra.mxu0 %v742
    %v920 = vpop.f32.mrf.mxu0
    %v921 = vadd.f32 %v823, %v920
    %v922 = vpop.f32.mrf.mxu0
    %v923 = vadd.f32 %v827, %v922
    %924 = vmatprep.mubr.f32.mxu0 %v745
    %925 = vmatmul.mubr.f32.gmra.mxu0 %v744
    %v926 = vpop.f32.mrf.mxu0
    %v927 = vadd.f32 %v823, %v926
    %v928 = vpop.f32.mrf.mxu0
    %v929 = vadd.f32 %v827, %v928
    %930 = vmatprep.mubr.f32.mxu0 %v747
    %931 = vmatmul.mubr.f32.gmra.mxu0 %v746
    %v932 = vpop.f32.mrf.mxu0
    %v933 = vadd.f32 %v823, %v932
    %v934 = vpop.f32.mrf.mxu0
    %v935 = vadd.f32 %v827, %v934
    %936 = vmatprep.mubr.f32.mxu0 %v749
    %937 = vmatmul.mubr.f32.gmra.mxu0 %v748
    %v938 = vpop.f32.mrf.mxu0
    %v939 = vadd.f32 %v823, %v938
    %v940 = vpop.f32.mrf.mxu0
    %v941 = vadd.f32 %v827, %v940
    %942 = vmatprep.mubr.f32.mxu0 %v751
    %943 = vmatmul.mubr.f32.gmra.mxu0 %v750
    %v944 = vpop.f32.mrf.mxu0
    %v945 = vadd.f32 %v823, %v944
    %v946 = vpop.f32.mrf.mxu0
    %v947 = vadd.f32 %v827, %v946
    %948 = vmatprep.mubr.f32.mxu0 %v753
    %949 = vmatmul.mubr.f32.gmra.mxu0 %v752
    %v950 = vpop.f32.mrf.mxu0
    %v951 = vadd.f32 %v823, %v950
    %v952 = vpop.f32.mrf.mxu0
    %v953 = vadd.f32 %v827, %v952
    %954 = vdwg.mxu0
    %955 = vst [vmem:[#allocation2] sm:$0xff] %v897
    %956 = vst [vmem:[#allocation2 + $0x8] sm:$0xff] %v899
    %957 = vst [vmem:[#allocation2 + $0x10] sm:$0xff] %v903
    %958 = vst [vmem:[#allocation2 + $0x18] sm:$0xff] %v905
    %959 = vst [vmem:[#allocation2 + $0x20] sm:$0xff] %v909
    %960 = vst [vmem:[#allocation2 + $0x28] sm:$0xff] %v911
    %961 = vst [vmem:[#allocation2 + $0x30] sm:$0xff] %v915
    %962 = vst [vmem:[#allocation2 + $0x38] sm:$0xff] %v917
    %963 = vst [vmem:[#allocation2 + $0x40] sm:$0xff] %v921
    %964 = vst [vmem:[#allocation2 + $0x48] sm:$0xff] %v923
    %965 = vst [vmem:[#allocation2 + $0x50] sm:$0xff] %v927
    %966 = vst [vmem:[#allocation2 + $0x58] sm:$0xff] %v929
    %967 = vst [vmem:[#allocation2 + $0x60] sm:$0xff] %v933
    %968 = vst [vmem:[#allocation2 + $0x68] sm:$0xff] %v935
    %969 = vst [vmem:[#allocation2 + $0x70] sm:$0xff] %v939
    %970 = vst [vmem:[#allocation2 + $0x78] sm:$0xff] %v941
    %971 = vst [vmem:[#allocation2 + $0x80] sm:$0xff] %v945
    %972 = vst [vmem:[#allocation2 + $0x88] sm:$0xff] %v947
    %973 = vst [vmem:[#allocation2 + $0x90] sm:$0xff] %v951
    %974 = vst [vmem:[#allocation2 + $0x98] sm:$0xff] %v953
    %s975 = sshll.u32 %s731, 4
    %976 = dma.done %s51, %s975
    %s977 = smul.u32 5, 256
    %s978 = smul.u32 %s977, 1
    %s979 = sshll.u32 %s978, 4
    %980 = dma.done %s63, %s979
    %v981 = vld [vmem:[#allocation5] sm:$0xff]
    %v982 = vld [vmem:[#allocation5 + $0x8] sm:$0xff]
    %v983 = vld [vmem:[#allocation5 + $0x10] sm:$0xff]
    %v984 = vld [vmem:[#allocation5 + $0x18] sm:$0xff]
    %v985 = vld [vmem:[#allocation5 + $0x20] sm:$0xff]
    %v986 = vld [vmem:[#allocation5 + $0x28] sm:$0xff]
    %v987 = vld [vmem:[#allocation5 + $0x30] sm:$0xff]
    %v988 = vld [vmem:[#allocation5 + $0x38] sm:$0xff]
    %v989 = vld [vmem:[#allocation5 + $0x40] sm:$0xff]
    %v990 = vld [vmem:[#allocation5 + $0x48] sm:$0xff]
    %v991 = vld [vmem:[#allocation5 + $0x50] sm:$0xff]
    %v992 = vld [vmem:[#allocation5 + $0x58] sm:$0xff]
    %v993 = vld [vmem:[#allocation5 + $0x60] sm:$0xff]
    %v994 = vld [vmem:[#allocation5 + $0x68] sm:$0xff]
    %v995 = vld [vmem:[#allocation5 + $0x70] sm:$0xff]
    %v996 = vld [vmem:[#allocation5 + $0x78] sm:$0xff]
    %v997 = vld [vmem:[#allocation5 + $0x80] sm:$0xff]
    %v998 = vld [vmem:[#allocation5 + $0x88] sm:$0xff]
    %v999 = vld [vmem:[#allocation5 + $0x90] sm:$0xff]
    %v1000 = vld [vmem:[#allocation5 + $0x98] sm:$0xff]
    %v1001 = vld [vmem:[#allocation5 + $0xa0] sm:$0xff]
    %v1002 = vld [vmem:[#allocation5 + $0xa8] sm:$0xff]
    %v1003 = vld [vmem:[#allocation5 + $0xb0] sm:$0xff]
    %v1004 = vld [vmem:[#allocation5 + $0xb8] sm:$0xff]
    %v1005 = vld [vmem:[#allocation5 + $0xc0] sm:$0xff]
    %v1006 = vld [vmem:[#allocation5 + $0xc8] sm:$0xff]
    %v1007 = vld [vmem:[#allocation5 + $0xd0] sm:$0xff]
    %v1008 = vld [vmem:[#allocation5 + $0xd8] sm:$0xff]
    %v1009 = vld [vmem:[#allocation5 + $0xe0] sm:$0xff]
    %v1010 = vld [vmem:[#allocation5 + $0xe8] sm:$0xff]
    %v1011 = vld [vmem:[#allocation5 + $0xf0] sm:$0xff]
    %v1012 = vld [vmem:[#allocation5 + $0xf8] sm:$0xff]
    %v1013 = vld [vmem:[#allocation5 + $0x100] sm:$0xff]
    %v1014 = vld [vmem:[#allocation5 + $0x108] sm:$0xff]
    %v1015 = vld [vmem:[#allocation5 + $0x110] sm:$0xff]
    %v1016 = vld [vmem:[#allocation5 + $0x118] sm:$0xff]
    %v1017 = vld [vmem:[#allocation5 + $0x120] sm:$0xff]
    %v1018 = vld [vmem:[#allocation5 + $0x128] sm:$0xff]
    %v1019 = vld [vmem:[#allocation5 + $0x130] sm:$0xff]
    %v1020 = vld [vmem:[#allocation5 + $0x138] sm:$0xff]
    %v1021 = vld [vmem:[#allocation5 + $0x140] sm:$0xff]
    %v1022 = vld [vmem:[#allocation5 + $0x148] sm:$0xff]
    %v1023 = vld [vmem:[#allocation5 + $0x150] sm:$0xff]
    %v1024 = vld [vmem:[#allocation5 + $0x158] sm:$0xff]
    %v1025 = vld [vmem:[#allocation5 + $0x160] sm:$0xff]
    %v1026 = vld [vmem:[#allocation5 + $0x168] sm:$0xff]
    %v1027 = vld [vmem:[#allocation5 + $0x170] sm:$0xff]
    %v1028 = vld [vmem:[#allocation5 + $0x178] sm:$0xff]
    %v1029 = vld [vmem:[#allocation5 + $0x180] sm:$0xff]
    %v1030 = vld [vmem:[#allocation5 + $0x188] sm:$0xff]
    %v1031 = vld [vmem:[#allocation5 + $0x190] sm:$0xff]
    %v1032 = vld [vmem:[#allocation5 + $0x198] sm:$0xff]
    %v1033 = vld [vmem:[#allocation5 + $0x1a0] sm:$0xff]
    %v1034 = vld [vmem:[#allocation5 + $0x1a8] sm:$0xff]
    %v1035 = vld [vmem:[#allocation5 + $0x1b0] sm:$0xff]
    %v1036 = vld [vmem:[#allocation5 + $0x1b8] sm:$0xff]
    %v1037 = vld [vmem:[#allocation5 + $0x1c0] sm:$0xff]
    %v1038 = vld [vmem:[#allocation5 + $0x1c8] sm:$0xff]
    %v1039 = vld [vmem:[#allocation5 + $0x1d0] sm:$0xff]
    %v1040 = vld [vmem:[#allocation5 + $0x1d8] sm:$0xff]
    %v1041 = vld [vmem:[#allocation5 + $0x1e0] sm:$0xff]
    %v1042 = vld [vmem:[#allocation5 + $0x1e8] sm:$0xff]
    %v1043 = vld [vmem:[#allocation5 + $0x1f0] sm:$0xff]
    %v1044 = vld [vmem:[#allocation5 + $0x1f8] sm:$0xff]
    %v1045 = vld [vmem:[#allocation2] sm:$0xff]
    %v1046 = vld [vmem:[#allocation2 + $0x8] sm:$0xff]
    %v1047 = vld [vmem:[#allocation2 + $0x10] sm:$0xff]
    %v1048 = vld [vmem:[#allocation2 + $0x18] sm:$0xff]
    %v1049 = vtanh.pop %v1045
    %v1050 = vtanh.pop %v1046
    %v1051 = vtanh.pop %v1047
    %v1052 = vtanh.pop %v1048
    %v1053 = vld [vmem:[#allocation6] sm:$0xff]
    %v1054 = vld [vmem:[#allocation6 + $0x8] sm:$0xff]
    %v1055 = vld [vmem:[#allocation6 + $0x10] sm:$0xff]
    %v1056 = vld [vmem:[#allocation6 + $0x18] sm:$0xff]
    %v1057 = vld [vmem:[#allocation6 + $0x20] sm:$0xff]
    %v1058 = vld [vmem:[#allocation6 + $0x28] sm:$0xff]
    %v1059 = vld [vmem:[#allocation6 + $0x30] sm:$0xff]
    %v1060 = vld [vmem:[#allocation6 + $0x38] sm:$0xff]
    %v1061 = vld [vmem:[#allocation6 + $0x40] sm:$0xff]
    %v1062 = vld [vmem:[#allocation6 + $0x48] sm:$0xff]
    %v1063 = vld [vmem:[#allocation6 + $0x50] sm:$0xff]
    %v1064 = vld [vmem:[#allocation6 + $0x58] sm:$0xff]
    %v1065 = vld [vmem:[#allocation6 + $0x60] sm:$0xff]
    %v1066 = vld [vmem:[#allocation6 + $0x68] sm:$0xff]
    %v1067 = vld [vmem:[#allocation6 + $0x70] sm:$0xff]
    %v1068 = vld [vmem:[#allocation6 + $0x78] sm:$0xff]
    %v1069 = vld [vmem:[#allocation6 + $0x80] sm:$0xff]
    %v1070 = vld [vmem:[#allocation6 + $0x88] sm:$0xff]
    %v1071 = vld [vmem:[#allocation6 + $0x90] sm:$0xff]
    %v1072 = vld [vmem:[#allocation6 + $0x98] sm:$0xff]
    %v1073 = vld [vmem:[#allocation6 + $0xa0] sm:$0xff]
    %v1074 = vld [vmem:[#allocation6 + $0xa8] sm:$0xff]
    %v1075 = vld [vmem:[#allocation6 + $0xb0] sm:$0xff]
    %v1076 = vld [vmem:[#allocation6 + $0xb8] sm:$0xff]
    %v1077 = vld [vmem:[#allocation6 + $0xc0] sm:$0xff]
    %v1078 = vld [vmem:[#allocation6 + $0xc8] sm:$0xff]
    %v1079 = vld [vmem:[#allocation6 + $0xd0] sm:$0xff]
    %v1080 = vld [vmem:[#allocation6 + $0xd8] sm:$0xff]
    %v1081 = vld [vmem:[#allocation6 + $0xe0] sm:$0xff]
    %v1082 = vld [vmem:[#allocation6 + $0xe8] sm:$0xff]
    %v1083 = vld [vmem:[#allocation6 + $0xf0] sm:$0xff]
    %v1084 = vld [vmem:[#allocation6 + $0xf8] sm:$0xff]
    %v1085 = vld [vmem:[%s350] sm:$0xff]
    %v1086 = vld [vmem:[%s350 + $0x8] sm:$0xff]
    %v1087 = vld [vmem:[%s350 + $0x10] sm:$0xff]
    %v1088 = vld [vmem:[%s350 + $0x18] sm:$0xff]
    %1089 = vmatprep.subr.mxu0 %v1012
    %1090 = vmatpush1.msra.mxu0 %v1011
    %1091 = vmatprep.subr.mxu0 %v1010
    %1092 = vmatpush1.msra.mxu0 %v1009
    %1093 = vmatprep.subr.mxu0 %v1008
    %1094 = vmatpush1.msra.mxu0 %v1007
    %1095 = vmatprep.subr.mxu0 %v1006
    %1096 = vmatpush1.msra.mxu0 %v1005
    %1097 = vmatprep.subr.mxu0 %v1004
    %1098 = vmatpush1.msra.mxu0 %v1003
    %1099 = vmatprep.subr.mxu0 %v1002
    %1100 = vmatpush1.msra.mxu0 %v1001
    %1101 = vmatprep.subr.mxu0 %v1000
    %1102 = vmatpush1.msra.mxu0 %v999
    %1103 = vmatprep.subr.mxu0 %v998
    %1104 = vmatpush1.msra.mxu0 %v997
    %1105 = vmatprep.subr.mxu0 %v996
    %1106 = vmatpush1.msra.mxu0 %v995
    %1107 = vmatprep.subr.mxu0 %v994
    %1108 = vmatpush1.msra.mxu0 %v993
    %1109 = vmatprep.subr.mxu0 %v992
    %1110 = vmatpush1.msra.mxu0 %v991
    %1111 = vmatprep.subr.mxu0 %v990
    %1112 = vmatpush1.msra.mxu0 %v989
    %1113 = vmatprep.subr.mxu0 %v988
    %1114 = vmatpush1.msra.mxu0 %v987
    %1115 = vmatprep.subr.mxu0 %v986
    %1116 = vmatpush1.msra.mxu0 %v985
    %1117 = vmatprep.subr.mxu0 %v984
    %1118 = vmatpush1.msra.mxu0 %v983
    %1119 = vmatprep.subr.mxu0 %v982
    %1120 = vmatpush1.msra.mxu0 %v981
    %1121 = vmatprep.subr.mxu0 %v1044
    %1122 = vmatpush2.msra.mxu0 %v1043
    %1123 = vmatprep.subr.mxu0 %v1042
    %1124 = vmatpush2.msra.mxu0 %v1041
    %1125 = vmatprep.subr.mxu0 %v1040
    %1126 = vmatpush2.msra.mxu0 %v1039
    %1127 = vmatprep.subr.mxu0 %v1038
    %1128 = vmatpush2.msra.mxu0 %v1037
    %1129 = vmatprep.subr.mxu0 %v1036
    %1130 = vmatpush2.msra.mxu0 %v1035
    %1131 = vmatprep.subr.mxu0 %v1034
    %1132 = vmatpush2.msra.mxu0 %v1033
    %1133 = vmatprep.subr.mxu0 %v1032
    %1134 = vmatpush2.msra.mxu0 %v1031
    %1135 = vmatprep.subr.mxu0 %v1030
    %1136 = vmatpush2.msra.mxu0 %v1029
    %1137 = vmatprep.subr.mxu0 %v1028
    %1138 = vmatpush2.msra.mxu0 %v1027
    %1139 = vmatprep.subr.mxu0 %v1026
    %1140 = vmatpush2.msra.mxu0 %v1025
    %1141 = vmatprep.subr.mxu0 %v1024
    %1142 = vmatpush2.msra.mxu0 %v1023
    %1143 = vmatprep.subr.mxu0 %v1022
    %1144 = vmatpush2.msra.mxu0 %v1021
    %1145 = vmatprep.subr.mxu0 %v1020
    %1146 = vmatpush2.msra.mxu0 %v1019
    %1147 = vmatprep.subr.mxu0 %v1018
    %1148 = vmatpush2.msra.mxu0 %v1017
    %1149 = vmatprep.subr.mxu0 %v1016
    %1150 = vmatpush2.msra.mxu0 %v1015
    %1151 = vmatprep.subr.mxu0 %v1014
    %1152 = vmatpush2.msra.mxu0 %v1013
    %1153 = vmatprep.mubr.f32.mxu0 %v1050
    %1154 = vmatmul.mubr.f32.gmra.mxu0 %v1049
    %v1155 = vpop.f32.mrf.mxu0
    %v1156 = vadd.f32 0.0, %v1155
    %v1157 = vpop.f32.mrf.mxu0
    %v1158 = vadd.f32 0.0, %v1157
    %1159 = vmatprep.mubr.f32.mxu0 %v1052
    %1160 = vmatmul.mubr.f32.gmra.mxu0 %v1051
    %v1161 = vpop.f32.mrf.mxu0
    %v1162 = vadd.f32 0.0, %v1161
    %v1163 = vpop.f32.mrf.mxu0
    %v1164 = vadd.f32 0.0, %v1163
    %1165 = vdwg.mxu0
    %v1166 = vadd.f32 %v1085, %v1156
    %v1167 = vadd.f32 %v1086, %v1158
    %v1168 = vadd.f32 %v1087, %v1162
    %v1169 = vadd.f32 %v1088, %v1164
    %v1170 = vtanh.pop %v1166
    %v1171 = vtanh.pop %v1167
    %v1172 = vtanh.pop %v1168
    %v1173 = vtanh.pop %v1169
    %s1174 = scalar_lea.vmem [#allocation6], 256
    %v1175 = vld [vmem:[%s1174] sm:$0xff]
    %v1176 = vld [vmem:[%s1174 + $0x8] sm:$0xff]
    %v1177 = vld [vmem:[%s1174 + $0x10] sm:$0xff]
    %v1178 = vld [vmem:[%s1174 + $0x18] sm:$0xff]
    %v1179 = vld [vmem:[%s1174 + $0x20] sm:$0xff]
    %v1180 = vld [vmem:[%s1174 + $0x28] sm:$0xff]
    %v1181 = vld [vmem:[%s1174 + $0x30] sm:$0xff]
    %v1182 = vld [vmem:[%s1174 + $0x38] sm:$0xff]
    %v1183 = vld [vmem:[%s1174 + $0x40] sm:$0xff]
    %v1184 = vld [vmem:[%s1174 + $0x48] sm:$0xff]
    %v1185 = vld [vmem:[%s1174 + $0x50] sm:$0xff]
    %v1186 = vld [vmem:[%s1174 + $0x58] sm:$0xff]
    %v1187 = vld [vmem:[%s1174 + $0x60] sm:$0xff]
    %v1188 = vld [vmem:[%s1174 + $0x68] sm:$0xff]
    %v1189 = vld [vmem:[%s1174 + $0x70] sm:$0xff]
    %v1190 = vld [vmem:[%s1174 + $0x78] sm:$0xff]
    %v1191 = vld [vmem:[%s1174 + $0x80] sm:$0xff]
    %v1192 = vld [vmem:[%s1174 + $0x88] sm:$0xff]
    %v1193 = vld [vmem:[%s1174 + $0x90] sm:$0xff]
    %v1194 = vld [vmem:[%s1174 + $0x98] sm:$0xff]
    %v1195 = vld [vmem:[%s1174 + $0xa0] sm:$0xff]
    %v1196 = vld [vmem:[%s1174 + $0xa8] sm:$0xff]
    %v1197 = vld [vmem:[%s1174 + $0xb0] sm:$0xff]
    %v1198 = vld [vmem:[%s1174 + $0xb8] sm:$0xff]
    %v1199 = vld [vmem:[%s1174 + $0xc0] sm:$0xff]
    %v1200 = vld [vmem:[%s1174 + $0xc8] sm:$0xff]
    %v1201 = vld [vmem:[%s1174 + $0xd0] sm:$0xff]
    %v1202 = vld [vmem:[%s1174 + $0xd8] sm:$0xff]
    %v1203 = vld [vmem:[%s1174 + $0xe0] sm:$0xff]
    %v1204 = vld [vmem:[%s1174 + $0xe8] sm:$0xff]
    %v1205 = vld [vmem:[%s1174 + $0xf0] sm:$0xff]
    %v1206 = vld [vmem:[%s1174 + $0xf8] sm:$0xff]
    %1207 = vmatprep.subr.mxu0 0.0
    %1208 = vmatpush1.msra.mxu0 %v1190
    %1209 = vmatprep.subr.mxu0 0.0
    %1210 = vmatpush1.msra.mxu0 %v1189
    %1211 = vmatprep.subr.mxu0 0.0
    %1212 = vmatpush1.msra.mxu0 %v1188
    %1213 = vmatprep.subr.mxu0 0.0
    %1214 = vmatpush1.msra.mxu0 %v1187
    %1215 = vmatprep.subr.mxu0 0.0
    %1216 = vmatpush1.msra.mxu0 %v1186
    %1217 = vmatprep.subr.mxu0 0.0
    %1218 = vmatpush1.msra.mxu0 %v1185
    %1219 = vmatprep.subr.mxu0 0.0
    %1220 = vmatpush1.msra.mxu0 %v1184
    %1221 = vmatprep.subr.mxu0 0.0
    %1222 = vmatpush1.msra.mxu0 %v1183
    %1223 = vmatprep.subr.mxu0 0.0
    %1224 = vmatpush1.msra.mxu0 %v1182
    %1225 = vmatprep.subr.mxu0 0.0
    %1226 = vmatpush1.msra.mxu0 %v1181
    %1227 = vmatprep.subr.mxu0 0.0
    %1228 = vmatpush1.msra.mxu0 %v1180
    %1229 = vmatprep.subr.mxu0 0.0
    %1230 = vmatpush1.msra.mxu0 %v1179
    %1231 = vmatprep.subr.mxu0 0.0
    %1232 = vmatpush1.msra.mxu0 %v1178
    %1233 = vmatprep.subr.mxu0 0.0
    %1234 = vmatpush1.msra.mxu0 %v1177
    %1235 = vmatprep.subr.mxu0 0.0
    %1236 = vmatpush1.msra.mxu0 %v1176
    %1237 = vmatprep.subr.mxu0 0.0
    %1238 = vmatpush1.msra.mxu0 %v1175
    %1239 = vmatprep.subr.mxu0 0.0
    %1240 = vmatpush2.msra.mxu0 %v1206
    %1241 = vmatprep.subr.mxu0 0.0
    %1242 = vmatpush2.msra.mxu0 %v1205
    %1243 = vmatprep.subr.mxu0 0.0
    %1244 = vmatpush2.msra.mxu0 %v1204
    %1245 = vmatprep.subr.mxu0 0.0
    %1246 = vmatpush2.msra.mxu0 %v1203
    %1247 = vmatprep.subr.mxu0 0.0
    %1248 = vmatpush2.msra.mxu0 %v1202
    %1249 = vmatprep.subr.mxu0 0.0
    %1250 = vmatpush2.msra.mxu0 %v1201
    %1251 = vmatprep.subr.mxu0 0.0
    %1252 = vmatpush2.msra.mxu0 %v1200
    %1253 = vmatprep.subr.mxu0 0.0
    %1254 = vmatpush2.msra.mxu0 %v1199
    %1255 = vmatprep.subr.mxu0 0.0
    %1256 = vmatpush2.msra.mxu0 %v1198
    %1257 = vmatprep.subr.mxu0 0.0
    %1258 = vmatpush2.msra.mxu0 %v1197
    %1259 = vmatprep.subr.mxu0 0.0
    %1260 = vmatpush2.msra.mxu0 %v1196
    %1261 = vmatprep.subr.mxu0 0.0
    %1262 = vmatpush2.msra.mxu0 %v1195
    %1263 = vmatprep.subr.mxu0 0.0
    %1264 = vmatpush2.msra.mxu0 %v1194
    %1265 = vmatprep.subr.mxu0 0.0
    %1266 = vmatpush2.msra.mxu0 %v1193
    %1267 = vmatprep.subr.mxu0 0.0
    %1268 = vmatpush2.msra.mxu0 %v1192
    %1269 = vmatprep.subr.mxu0 0.0
    %1270 = vmatpush2.msra.mxu0 %v1191
    %1271 = vmatprep.mubr.f32.mxu0 %v1171
    %1272 = vmatmul.mubr.f32.gmra.mxu0 %v1170
    %v1273 = vpop.f32.mrf.mxu0
    %v1274 = vadd.f32 0.0, %v1273
    %v1275 = vpop.f32.mrf.mxu0
    %1276 = vmatprep.mubr.f32.mxu0 %v1173
    %1277 = vmatmul.mubr.f32.gmra.mxu0 %v1172
    %v1278 = vpop.f32.mrf.mxu0
    %v1279 = vadd.f32 0.0, %v1278
    %v1280 = vpop.f32.mrf.mxu0
    %1281 = vdwg.mxu0
    %1282 = vmatprep.subr.mxu0 0.0
    %1283 = vmatpush1.msra.mxu0 %v1068
    %1284 = vmatprep.subr.mxu0 0.0
    %1285 = vmatpush1.msra.mxu0 %v1067
    %1286 = vmatprep.subr.mxu0 0.0
    %1287 = vmatpush1.msra.mxu0 %v1066
    %1288 = vmatprep.subr.mxu0 0.0
    %1289 = vmatpush1.msra.mxu0 %v1065
    %1290 = vmatprep.subr.mxu0 0.0
    %1291 = vmatpush1.msra.mxu0 %v1064
    %1292 = vmatprep.subr.mxu0 0.0
    %1293 = vmatpush1.msra.mxu0 %v1063
    %1294 = vmatprep.subr.mxu0 0.0
    %1295 = vmatpush1.msra.mxu0 %v1062
    %1296 = vmatprep.subr.mxu0 0.0
    %1297 = vmatpush1.msra.mxu0 %v1061
    %1298 = vmatprep.subr.mxu0 0.0
    %1299 = vmatpush1.msra.mxu0 %v1060
    %1300 = vmatprep.subr.mxu0 0.0
    %1301 = vmatpush1.msra.mxu0 %v1059
    %1302 = vmatprep.subr.mxu0 0.0
    %1303 = vmatpush1.msra.mxu0 %v1058
    %1304 = vmatprep.subr.mxu0 0.0
    %1305 = vmatpush1.msra.mxu0 %v1057
    %1306 = vmatprep.subr.mxu0 0.0
    %1307 = vmatpush1.msra.mxu0 %v1056
    %1308 = vmatprep.subr.mxu0 0.0
    %1309 = vmatpush1.msra.mxu0 %v1055
    %1310 = vmatprep.subr.mxu0 0.0
    %1311 = vmatpush1.msra.mxu0 %v1054
    %1312 = vmatprep.subr.mxu0 0.0
    %1313 = vmatpush1.msra.mxu0 %v1053
    %1314 = vmatprep.subr.mxu0 0.0
    %1315 = vmatpush2.msra.mxu0 %v1084
    %1316 = vmatprep.subr.mxu0 0.0
    %1317 = vmatpush2.msra.mxu0 %v1083
    %1318 = vmatprep.subr.mxu0 0.0
    %1319 = vmatpush2.msra.mxu0 %v1082
    %1320 = vmatprep.subr.mxu0 0.0
    %1321 = vmatpush2.msra.mxu0 %v1081
    %1322 = vmatprep.subr.mxu0 0.0
    %1323 = vmatpush2.msra.mxu0 %v1080
    %1324 = vmatprep.subr.mxu0 0.0
    %1325 = vmatpush2.msra.mxu0 %v1079
    %1326 = vmatprep.subr.mxu0 0.0
    %1327 = vmatpush2.msra.mxu0 %v1078
    %1328 = vmatprep.subr.mxu0 0.0
    %1329 = vmatpush2.msra.mxu0 %v1077
    %1330 = vmatprep.subr.mxu0 0.0
    %1331 = vmatpush2.msra.mxu0 %v1076
    %1332 = vmatprep.subr.mxu0 0.0
    %1333 = vmatpush2.msra.mxu0 %v1075
    %1334 = vmatprep.subr.mxu0 0.0
    %1335 = vmatpush2.msra.mxu0 %v1074
    %1336 = vmatprep.subr.mxu0 0.0
    %1337 = vmatpush2.msra.mxu0 %v1073
    %1338 = vmatprep.subr.mxu0 0.0
    %1339 = vmatpush2.msra.mxu0 %v1072
    %1340 = vmatprep.subr.mxu0 0.0
    %1341 = vmatpush2.msra.mxu0 %v1071
    %1342 = vmatprep.subr.mxu0 0.0
    %1343 = vmatpush2.msra.mxu0 %v1070
    %1344 = vmatprep.subr.mxu0 0.0
    %1345 = vmatpush2.msra.mxu0 %v1069
    %1346 = vmatprep.mubr.f32.mxu0 %v1050
    %1347 = vmatmul.mubr.f32.gmra.mxu0 %v1049
    %v1348 = vpop.f32.mrf.mxu0
    %v1349 = vadd.f32 %v1274, %v1348
    %v1350 = vpop.f32.mrf.mxu0
    %1351 = vmatprep.mubr.f32.mxu0 %v1052
    %1352 = vmatmul.mubr.f32.gmra.mxu0 %v1051
    %v1353 = vpop.f32.mrf.mxu0
    %v1354 = vadd.f32 %v1279, %v1353
    %v1355 = vpop.f32.mrf.mxu0
    %1356 = vdwg.mxu0
    %v1357 = vld [vmem:[%s445] sm:$0xff]
    %v1358 = vld [vmem:[%s445 + $0x8] sm:$0xff]
    %v1359 = vld [vmem:[%s445 + $0x10] sm:$0xff]
    %v1360 = vld [vmem:[%s445 + $0x18] sm:$0xff]
    %1361 = vmatprep.subr.mxu0 %v1012
    %1362 = vmatpush1.msra.mxu0 %v1011
    %1363 = vmatprep.subr.mxu0 %v1010
    %1364 = vmatpush1.msra.mxu0 %v1009
    %1365 = vmatprep.subr.mxu0 %v1008
    %1366 = vmatpush1.msra.mxu0 %v1007
    %1367 = vmatprep.subr.mxu0 %v1006
    %1368 = vmatpush1.msra.mxu0 %v1005
    %1369 = vmatprep.subr.mxu0 %v1004
    %1370 = vmatpush1.msra.mxu0 %v1003
    %1371 = vmatprep.subr.mxu0 %v1002
    %1372 = vmatpush1.msra.mxu0 %v1001
    %1373 = vmatprep.subr.mxu0 %v1000
    %1374 = vmatpush1.msra.mxu0 %v999
    %1375 = vmatprep.subr.mxu0 %v998
    %1376 = vmatpush1.msra.mxu0 %v997
    %1377 = vmatprep.subr.mxu0 %v996
    %1378 = vmatpush1.msra.mxu0 %v995
    %1379 = vmatprep.subr.mxu0 %v994
    %1380 = vmatpush1.msra.mxu0 %v993
    %1381 = vmatprep.subr.mxu0 %v992
    %1382 = vmatpush1.msra.mxu0 %v991
    %1383 = vmatprep.subr.mxu0 %v990
    %1384 = vmatpush1.msra.mxu0 %v989
    %1385 = vmatprep.subr.mxu0 %v988
    %1386 = vmatpush1.msra.mxu0 %v987
    %1387 = vmatprep.subr.mxu0 %v986
    %1388 = vmatpush1.msra.mxu0 %v985
    %1389 = vmatprep.subr.mxu0 %v984
    %1390 = vmatpush1.msra.mxu0 %v983
    %1391 = vmatprep.subr.mxu0 %v982
    %1392 = vmatpush1.msra.mxu0 %v981
    %1393 = vmatprep.subr.mxu0 %v1044
    %1394 = vmatpush2.msra.mxu0 %v1043
    %1395 = vmatprep.subr.mxu0 %v1042
    %1396 = vmatpush2.msra.mxu0 %v1041
    %1397 = vmatprep.subr.mxu0 %v1040
    %1398 = vmatpush2.msra.mxu0 %v1039
    %1399 = vmatprep.subr.mxu0 %v1038
    %1400 = vmatpush2.msra.mxu0 %v1037
    %1401 = vmatprep.subr.mxu0 %v1036
    %1402 = vmatpush2.msra.mxu0 %v1035
    %1403 = vmatprep.subr.mxu0 %v1034
    %1404 = vmatpush2.msra.mxu0 %v1033
    %1405 = vmatprep.subr.mxu0 %v1032
    %1406 = vmatpush2.msra.mxu0 %v1031
    %1407 = vmatprep.subr.mxu0 %v1030
    %1408 = vmatpush2.msra.mxu0 %v1029
    %1409 = vmatprep.subr.mxu0 %v1028
    %1410 = vmatpush2.msra.mxu0 %v1027
    %1411 = vmatprep.subr.mxu0 %v1026
    %1412 = vmatpush2.msra.mxu0 %v1025
    %1413 = vmatprep.subr.mxu0 %v1024
    %1414 = vmatpush2.msra.mxu0 %v1023
    %1415 = vmatprep.subr.mxu0 %v1022
    %1416 = vmatpush2.msra.mxu0 %v1021
    %1417 = vmatprep.subr.mxu0 %v1020
    %1418 = vmatpush2.msra.mxu0 %v1019
    %1419 = vmatprep.subr.mxu0 %v1018
    %1420 = vmatpush2.msra.mxu0 %v1017
    %1421 = vmatprep.subr.mxu0 %v1016
    %1422 = vmatpush2.msra.mxu0 %v1015
    %1423 = vmatprep.subr.mxu0 %v1014
    %1424 = vmatpush2.msra.mxu0 %v1013
    %1425 = vmatprep.mubr.f32.mxu0 %v1171
    %1426 = vmatmul.mubr.f32.gmra.mxu0 %v1170
    %v1427 = vpop.f32.mrf.mxu0
    %v1428 = vadd.f32 0.0, %v1427
    %v1429 = vpop.f32.mrf.mxu0
    %v1430 = vadd.f32 0.0, %v1429
    %1431 = vmatprep.mubr.f32.mxu0 %v1173
    %1432 = vmatmul.mubr.f32.gmra.mxu0 %v1172
    %v1433 = vpop.f32.mrf.mxu0
    %v1434 = vadd.f32 0.0, %v1433
    %v1435 = vpop.f32.mrf.mxu0
    %v1436 = vadd.f32 0.0, %v1435
    %1437 = vdwg.mxu0
    %v1438 = vadd.f32 %v1357, %v1428
    %v1439 = vadd.f32 %v1358, %v1430
    %v1440 = vadd.f32 %v1359, %v1434
    %v1441 = vadd.f32 %v1360, %v1436
    %v1442 = vtanh.pop %v1438
    %v1443 = vtanh.pop %v1439
    %v1444 = vtanh.pop %v1440
    %v1445 = vtanh.pop %v1441
    %s1446 = scalar_lea.vmem [#allocation6], 512
    %v1447 = vld [vmem:[%s1446] sm:$0xff]
    %v1448 = vld [vmem:[%s1446 + $0x8] sm:$0xff]
    %v1449 = vld [vmem:[%s1446 + $0x10] sm:$0xff]
    %v1450 = vld [vmem:[%s1446 + $0x18] sm:$0xff]
    %v1451 = vld [vmem:[%s1446 + $0x20] sm:$0xff]
    %v1452 = vld [vmem:[%s1446 + $0x28] sm:$0xff]
    %v1453 = vld [vmem:[%s1446 + $0x30] sm:$0xff]
    %v1454 = vld [vmem:[%s1446 + $0x38] sm:$0xff]
    %v1455 = vld [vmem:[%s1446 + $0x40] sm:$0xff]
    %v1456 = vld [vmem:[%s1446 + $0x48] sm:$0xff]
    %v1457 = vld [vmem:[%s1446 + $0x50] sm:$0xff]
    %v1458 = vld [vmem:[%s1446 + $0x58] sm:$0xff]
    %v1459 = vld [vmem:[%s1446 + $0x60] sm:$0xff]
    %v1460 = vld [vmem:[%s1446 + $0x68] sm:$0xff]
    %v1461 = vld [vmem:[%s1446 + $0x70] sm:$0xff]
    %v1462 = vld [vmem:[%s1446 + $0x78] sm:$0xff]
    %v1463 = vld [vmem:[%s1446 + $0x80] sm:$0xff]
    %v1464 = vld [vmem:[%s1446 + $0x88] sm:$0xff]
    %v1465 = vld [vmem:[%s1446 + $0x90] sm:$0xff]
    %v1466 = vld [vmem:[%s1446 + $0x98] sm:$0xff]
    %v1467 = vld [vmem:[%s1446 + $0xa0] sm:$0xff]
    %v1468 = vld [vmem:[%s1446 + $0xa8] sm:$0xff]
    %v1469 = vld [vmem:[%s1446 + $0xb0] sm:$0xff]
    %v1470 = vld [vmem:[%s1446 + $0xb8] sm:$0xff]
    %v1471 = vld [vmem:[%s1446 + $0xc0] sm:$0xff]
    %v1472 = vld [vmem:[%s1446 + $0xc8] sm:$0xff]
    %v1473 = vld [vmem:[%s1446 + $0xd0] sm:$0xff]
    %v1474 = vld [vmem:[%s1446 + $0xd8] sm:$0xff]
    %v1475 = vld [vmem:[%s1446 + $0xe0] sm:$0xff]
    %v1476 = vld [vmem:[%s1446 + $0xe8] sm:$0xff]
    %v1477 = vld [vmem:[%s1446 + $0xf0] sm:$0xff]
    %v1478 = vld [vmem:[%s1446 + $0xf8] sm:$0xff]
    %1479 = vmatprep.subr.mxu0 0.0
    %1480 = vmatpush1.msra.mxu0 %v1462
    %1481 = vmatprep.subr.mxu0 0.0
    %1482 = vmatpush1.msra.mxu0 %v1461
    %1483 = vmatprep.subr.mxu0 0.0
    %1484 = vmatpush1.msra.mxu0 %v1460
    %1485 = vmatprep.subr.mxu0 0.0
    %1486 = vmatpush1.msra.mxu0 %v1459
    %1487 = vmatprep.subr.mxu0 0.0
    %1488 = vmatpush1.msra.mxu0 %v1458
    %1489 = vmatprep.subr.mxu0 0.0
    %1490 = vmatpush1.msra.mxu0 %v1457
    %1491 = vmatprep.subr.mxu0 0.0
    %1492 = vmatpush1.msra.mxu0 %v1456
    %1493 = vmatprep.subr.mxu0 0.0
    %1494 = vmatpush1.msra.mxu0 %v1455
    %1495 = vmatprep.subr.mxu0 0.0
    %1496 = vmatpush1.msra.mxu0 %v1454
    %1497 = vmatprep.subr.mxu0 0.0
    %1498 = vmatpush1.msra.mxu0 %v1453
    %1499 = vmatprep.subr.mxu0 0.0
    %1500 = vmatpush1.msra.mxu0 %v1452
    %1501 = vmatprep.subr.mxu0 0.0
    %1502 = vmatpush1.msra.mxu0 %v1451
    %1503 = vmatprep.subr.mxu0 0.0
    %1504 = vmatpush1.msra.mxu0 %v1450
    %1505 = vmatprep.subr.mxu0 0.0
    %1506 = vmatpush1.msra.mxu0 %v1449
    %1507 = vmatprep.subr.mxu0 0.0
    %1508 = vmatpush1.msra.mxu0 %v1448
    %1509 = vmatprep.subr.mxu0 0.0
    %1510 = vmatpush1.msra.mxu0 %v1447
    %1511 = vmatprep.subr.mxu0 0.0
    %1512 = vmatpush2.msra.mxu0 %v1478
    %1513 = vmatprep.subr.mxu0 0.0
    %1514 = vmatpush2.msra.mxu0 %v1477
    %1515 = vmatprep.subr.mxu0 0.0
    %1516 = vmatpush2.msra.mxu0 %v1476
    %1517 = vmatprep.subr.mxu0 0.0
    %1518 = vmatpush2.msra.mxu0 %v1475
    %1519 = vmatprep.subr.mxu0 0.0
    %1520 = vmatpush2.msra.mxu0 %v1474
    %1521 = vmatprep.subr.mxu0 0.0
    %1522 = vmatpush2.msra.mxu0 %v1473
    %1523 = vmatprep.subr.mxu0 0.0
    %1524 = vmatpush2.msra.mxu0 %v1472
    %1525 = vmatprep.subr.mxu0 0.0
    %1526 = vmatpush2.msra.mxu0 %v1471
    %1527 = vmatprep.subr.mxu0 0.0
    %1528 = vmatpush2.msra.mxu0 %v1470
    %1529 = vmatprep.subr.mxu0 0.0
    %1530 = vmatpush2.msra.mxu0 %v1469
    %1531 = vmatprep.subr.mxu0 0.0
    %1532 = vmatpush2.msra.mxu0 %v1468
    %1533 = vmatprep.subr.mxu0 0.0
    %1534 = vmatpush2.msra.mxu0 %v1467
    %1535 = vmatprep.subr.mxu0 0.0
    %1536 = vmatpush2.msra.mxu0 %v1466
    %1537 = vmatprep.subr.mxu0 0.0
    %1538 = vmatpush2.msra.mxu0 %v1465
    %1539 = vmatprep.subr.mxu0 0.0
    %1540 = vmatpush2.msra.mxu0 %v1464
    %1541 = vmatprep.subr.mxu0 0.0
    %1542 = vmatpush2.msra.mxu0 %v1463
    %1543 = vmatprep.mubr.f32.mxu0 %v1443
    %1544 = vmatmul.mubr.f32.gmra.mxu0 %v1442
    %v1545 = vpop.f32.mrf.mxu0
    %v1546 = vadd.f32 0.0, %v1545
    %v1547 = vpop.f32.mrf.mxu0
    %1548 = vmatprep.mubr.f32.mxu0 %v1445
    %1549 = vmatmul.mubr.f32.gmra.mxu0 %v1444
    %v1550 = vpop.f32.mrf.mxu0
    %v1551 = vadd.f32 0.0, %v1550
    %v1552 = vpop.f32.mrf.mxu0
    %1553 = vdwg.mxu0
    %v1554 = vadd.f32 %v1349, %v1546
    %v1555 = vadd.f32 %v1354, %v1551
    %v1556 = vld [vmem:[%s540] sm:$0xff]
    %v1557 = vld [vmem:[%s540 + $0x8] sm:$0xff]
    %v1558 = vld [vmem:[%s540 + $0x10] sm:$0xff]
    %v1559 = vld [vmem:[%s540 + $0x18] sm:$0xff]
    %1560 = vmatprep.subr.mxu0 %v1012
    %1561 = vmatpush1.msra.mxu0 %v1011
    %1562 = vmatprep.subr.mxu0 %v1010
    %1563 = vmatpush1.msra.mxu0 %v1009
    %1564 = vmatprep.subr.mxu0 %v1008
    %1565 = vmatpush1.msra.mxu0 %v1007
    %1566 = vmatprep.subr.mxu0 %v1006
    %1567 = vmatpush1.msra.mxu0 %v1005
    %1568 = vmatprep.subr.mxu0 %v1004
    %1569 = vmatpush1.msra.mxu0 %v1003
    %1570 = vmatprep.subr.mxu0 %v1002
    %1571 = vmatpush1.msra.mxu0 %v1001
    %1572 = vmatprep.subr.mxu0 %v1000
    %1573 = vmatpush1.msra.mxu0 %v999
    %1574 = vmatprep.subr.mxu0 %v998
    %1575 = vmatpush1.msra.mxu0 %v997
    %1576 = vmatprep.subr.mxu0 %v996
    %1577 = vmatpush1.msra.mxu0 %v995
    %1578 = vmatprep.subr.mxu0 %v994
    %1579 = vmatpush1.msra.mxu0 %v993
    %1580 = vmatprep.subr.mxu0 %v992
    %1581 = vmatpush1.msra.mxu0 %v991
    %1582 = vmatprep.subr.mxu0 %v990
    %1583 = vmatpush1.msra.mxu0 %v989
    %1584 = vmatprep.subr.mxu0 %v988
    %1585 = vmatpush1.msra.mxu0 %v987
    %1586 = vmatprep.subr.mxu0 %v986
    %1587 = vmatpush1.msra.mxu0 %v985
    %1588 = vmatprep.subr.mxu0 %v984
    %1589 = vmatpush1.msra.mxu0 %v983
    %1590 = vmatprep.subr.mxu0 %v982
    %1591 = vmatpush1.msra.mxu0 %v981
    %1592 = vmatprep.subr.mxu0 %v1044
    %1593 = vmatpush2.msra.mxu0 %v1043
    %1594 = vmatprep.subr.mxu0 %v1042
    %1595 = vmatpush2.msra.mxu0 %v1041
    %1596 = vmatprep.subr.mxu0 %v1040
    %1597 = vmatpush2.msra.mxu0 %v1039
    %1598 = vmatprep.subr.mxu0 %v1038
    %1599 = vmatpush2.msra.mxu0 %v1037
    %1600 = vmatprep.subr.mxu0 %v1036
    %1601 = vmatpush2.msra.mxu0 %v1035
    %1602 = vmatprep.subr.mxu0 %v1034
    %1603 = vmatpush2.msra.mxu0 %v1033
    %1604 = vmatprep.subr.mxu0 %v1032
    %1605 = vmatpush2.msra.mxu0 %v1031
    %1606 = vmatprep.subr.mxu0 %v1030
    %1607 = vmatpush2.msra.mxu0 %v1029
    %1608 = vmatprep.subr.mxu0 %v1028
    %1609 = vmatpush2.msra.mxu0 %v1027
    %1610 = vmatprep.subr.mxu0 %v1026
    %1611 = vmatpush2.msra.mxu0 %v1025
    %1612 = vmatprep.subr.mxu0 %v1024
    %1613 = vmatpush2.msra.mxu0 %v1023
    %1614 = vmatprep.subr.mxu0 %v1022
    %1615 = vmatpush2.msra.mxu0 %v1021
    %1616 = vmatprep.subr.mxu0 %v1020
    %1617 = vmatpush2.msra.mxu0 %v1019
    %1618 = vmatprep.subr.mxu0 %v1018
    %1619 = vmatpush2.msra.mxu0 %v1017
    %1620 = vmatprep.subr.mxu0 %v1016
    %1621 = vmatpush2.msra.mxu0 %v1015
    %1622 = vmatprep.subr.mxu0 %v1014
    %1623 = vmatpush2.msra.mxu0 %v1013
    %1624 = vmatprep.mubr.f32.mxu0 %v1443
    %1625 = vmatmul.mubr.f32.gmra.mxu0 %v1442
    %v1626 = vpop.f32.mrf.mxu0
    %v1627 = vadd.f32 0.0, %v1626
    %v1628 = vpop.f32.mrf.mxu0
    %v1629 = vadd.f32 0.0, %v1628
    %1630 = vmatprep.mubr.f32.mxu0 %v1445
    %1631 = vmatmul.mubr.f32.gmra.mxu0 %v1444
    %v1632 = vpop.f32.mrf.mxu0
    %v1633 = vadd.f32 0.0, %v1632
    %v1634 = vpop.f32.mrf.mxu0
    %v1635 = vadd.f32 0.0, %v1634
    %1636 = vdwg.mxu0
    %v1637 = vadd.f32 %v1556, %v1627
    %v1638 = vadd.f32 %v1557, %v1629
    %v1639 = vadd.f32 %v1558, %v1633
    %v1640 = vadd.f32 %v1559, %v1635
    %v1641 = vtanh.pop %v1637
    %v1642 = vtanh.pop %v1638
    %v1643 = vtanh.pop %v1639
    %v1644 = vtanh.pop %v1640
    %s1645 = scalar_lea.vmem [#allocation6], 768
    %v1646 = vld [vmem:[%s1645] sm:$0xff]
    %v1647 = vld [vmem:[%s1645 + $0x8] sm:$0xff]
    %v1648 = vld [vmem:[%s1645 + $0x10] sm:$0xff]
    %v1649 = vld [vmem:[%s1645 + $0x18] sm:$0xff]
    %v1650 = vld [vmem:[%s1645 + $0x20] sm:$0xff]
    %v1651 = vld [vmem:[%s1645 + $0x28] sm:$0xff]
    %v1652 = vld [vmem:[%s1645 + $0x30] sm:$0xff]
    %v1653 = vld [vmem:[%s1645 + $0x38] sm:$0xff]
    %v1654 = vld [vmem:[%s1645 + $0x40] sm:$0xff]
    %v1655 = vld [vmem:[%s1645 + $0x48] sm:$0xff]
    %v1656 = vld [vmem:[%s1645 + $0x50] sm:$0xff]
    %v1657 = vld [vmem:[%s1645 + $0x58] sm:$0xff]
    %v1658 = vld [vmem:[%s1645 + $0x60] sm:$0xff]
    %v1659 = vld [vmem:[%s1645 + $0x68] sm:$0xff]
    %v1660 = vld [vmem:[%s1645 + $0x70] sm:$0xff]
    %v1661 = vld [vmem:[%s1645 + $0x78] sm:$0xff]
    %v1662 = vld [vmem:[%s1645 + $0x80] sm:$0xff]
    %v1663 = vld [vmem:[%s1645 + $0x88] sm:$0xff]
    %v1664 = vld [vmem:[%s1645 + $0x90] sm:$0xff]
    %v1665 = vld [vmem:[%s1645 + $0x98] sm:$0xff]
    %v1666 = vld [vmem:[%s1645 + $0xa0] sm:$0xff]
    %v1667 = vld [vmem:[%s1645 + $0xa8] sm:$0xff]
    %v1668 = vld [vmem:[%s1645 + $0xb0] sm:$0xff]
    %v1669 = vld [vmem:[%s1645 + $0xb8] sm:$0xff]
    %v1670 = vld [vmem:[%s1645 + $0xc0] sm:$0xff]
    %v1671 = vld [vmem:[%s1645 + $0xc8] sm:$0xff]
    %v1672 = vld [vmem:[%s1645 + $0xd0] sm:$0xff]
    %v1673 = vld [vmem:[%s1645 + $0xd8] sm:$0xff]
    %v1674 = vld [vmem:[%s1645 + $0xe0] sm:$0xff]
    %v1675 = vld [vmem:[%s1645 + $0xe8] sm:$0xff]
    %v1676 = vld [vmem:[%s1645 + $0xf0] sm:$0xff]
    %v1677 = vld [vmem:[%s1645 + $0xf8] sm:$0xff]
    %1678 = vmatprep.subr.mxu0 0.0
    %1679 = vmatpush1.msra.mxu0 %v1661
    %1680 = vmatprep.subr.mxu0 0.0
    %1681 = vmatpush1.msra.mxu0 %v1660
    %1682 = vmatprep.subr.mxu0 0.0
    %1683 = vmatpush1.msra.mxu0 %v1659
    %1684 = vmatprep.subr.mxu0 0.0
    %1685 = vmatpush1.msra.mxu0 %v1658
    %1686 = vmatprep.subr.mxu0 0.0
    %1687 = vmatpush1.msra.mxu0 %v1657
    %1688 = vmatprep.subr.mxu0 0.0
    %1689 = vmatpush1.msra.mxu0 %v1656
    %1690 = vmatprep.subr.mxu0 0.0
    %1691 = vmatpush1.msra.mxu0 %v1655
    %1692 = vmatprep.subr.mxu0 0.0
    %1693 = vmatpush1.msra.mxu0 %v1654
    %1694 = vmatprep.subr.mxu0 0.0
    %1695 = vmatpush1.msra.mxu0 %v1653
    %1696 = vmatprep.subr.mxu0 0.0
    %1697 = vmatpush1.msra.mxu0 %v1652
    %1698 = vmatprep.subr.mxu0 0.0
    %1699 = vmatpush1.msra.mxu0 %v1651
    %1700 = vmatprep.subr.mxu0 0.0
    %1701 = vmatpush1.msra.mxu0 %v1650
    %1702 = vmatprep.subr.mxu0 0.0
    %1703 = vmatpush1.msra.mxu0 %v1649
    %1704 = vmatprep.subr.mxu0 0.0
    %1705 = vmatpush1.msra.mxu0 %v1648
    %1706 = vmatprep.subr.mxu0 0.0
    %1707 = vmatpush1.msra.mxu0 %v1647
    %1708 = vmatprep.subr.mxu0 0.0
    %1709 = vmatpush1.msra.mxu0 %v1646
    %1710 = vmatprep.subr.mxu0 0.0
    %1711 = vmatpush2.msra.mxu0 %v1677
    %1712 = vmatprep.subr.mxu0 0.0
    %1713 = vmatpush2.msra.mxu0 %v1676
    %1714 = vmatprep.subr.mxu0 0.0
    %1715 = vmatpush2.msra.mxu0 %v1675
    %1716 = vmatprep.subr.mxu0 0.0
    %1717 = vmatpush2.msra.mxu0 %v1674
    %1718 = vmatprep.subr.mxu0 0.0
    %1719 = vmatpush2.msra.mxu0 %v1673
    %1720 = vmatprep.subr.mxu0 0.0
    %1721 = vmatpush2.msra.mxu0 %v1672
    %1722 = vmatprep.subr.mxu0 0.0
    %1723 = vmatpush2.msra.mxu0 %v1671
    %1724 = vmatprep.subr.mxu0 0.0
    %1725 = vmatpush2.msra.mxu0 %v1670
    %1726 = vmatprep.subr.mxu0 0.0
    %1727 = vmatpush2.msra.mxu0 %v1669
    %1728 = vmatprep.subr.mxu0 0.0
    %1729 = vmatpush2.msra.mxu0 %v1668
    %1730 = vmatprep.subr.mxu0 0.0
    %1731 = vmatpush2.msra.mxu0 %v1667
    %1732 = vmatprep.subr.mxu0 0.0
    %1733 = vmatpush2.msra.mxu0 %v1666
    %1734 = vmatprep.subr.mxu0 0.0
    %1735 = vmatpush2.msra.mxu0 %v1665
    %1736 = vmatprep.subr.mxu0 0.0
    %1737 = vmatpush2.msra.mxu0 %v1664
    %1738 = vmatprep.subr.mxu0 0.0
    %1739 = vmatpush2.msra.mxu0 %v1663
    %1740 = vmatprep.subr.mxu0 0.0
    %1741 = vmatpush2.msra.mxu0 %v1662
    %1742 = vmatprep.mubr.f32.mxu0 %v1642
    %1743 = vmatmul.mubr.f32.gmra.mxu0 %v1641
    %v1744 = vpop.f32.mrf.mxu0
    %v1745 = vadd.f32 0.0, %v1744
    %v1746 = vpop.f32.mrf.mxu0
    %1747 = vmatprep.mubr.f32.mxu0 %v1644
    %1748 = vmatmul.mubr.f32.gmra.mxu0 %v1643
    %v1749 = vpop.f32.mrf.mxu0
    %v1750 = vadd.f32 0.0, %v1749
    %v1751 = vpop.f32.mrf.mxu0
    %1752 = vdwg.mxu0
    %v1753 = vadd.f32 %v1554, %v1745
    %v1754 = vadd.f32 %v1555, %v1750
    %v1755 = vld [vmem:[%s635] sm:$0xff]
    %v1756 = vld [vmem:[%s635 + $0x8] sm:$0xff]
    %v1757 = vld [vmem:[%s635 + $0x10] sm:$0xff]
    %v1758 = vld [vmem:[%s635 + $0x18] sm:$0xff]
    %1759 = vmatprep.subr.mxu0 %v1012
    %1760 = vmatpush1.msra.mxu0 %v1011
    %1761 = vmatprep.subr.mxu0 %v1010
    %1762 = vmatpush1.msra.mxu0 %v1009
    %1763 = vmatprep.subr.mxu0 %v1008
    %1764 = vmatpush1.msra.mxu0 %v1007
    %1765 = vmatprep.subr.mxu0 %v1006
    %1766 = vmatpush1.msra.mxu0 %v1005
    %1767 = vmatprep.subr.mxu0 %v1004
    %1768 = vmatpush1.msra.mxu0 %v1003
    %1769 = vmatprep.subr.mxu0 %v1002
    %1770 = vmatpush1.msra.mxu0 %v1001
    %1771 = vmatprep.subr.mxu0 %v1000
    %1772 = vmatpush1.msra.mxu0 %v999
    %1773 = vmatprep.subr.mxu0 %v998
    %1774 = vmatpush1.msra.mxu0 %v997
    %1775 = vmatprep.subr.mxu0 %v996
    %1776 = vmatpush1.msra.mxu0 %v995
    %1777 = vmatprep.subr.mxu0 %v994
    %1778 = vmatpush1.msra.mxu0 %v993
    %1779 = vmatprep.subr.mxu0 %v992
    %1780 = vmatpush1.msra.mxu0 %v991
    %1781 = vmatprep.subr.mxu0 %v990
    %1782 = vmatpush1.msra.mxu0 %v989
    %1783 = vmatprep.subr.mxu0 %v988
    %1784 = vmatpush1.msra.mxu0 %v987
    %1785 = vmatprep.subr.mxu0 %v986
    %1786 = vmatpush1.msra.mxu0 %v985
    %1787 = vmatprep.subr.mxu0 %v984
    %1788 = vmatpush1.msra.mxu0 %v983
    %1789 = vmatprep.subr.mxu0 %v982
    %1790 = vmatpush1.msra.mxu0 %v981
    %1791 = vmatprep.subr.mxu0 %v1044
    %1792 = vmatpush2.msra.mxu0 %v1043
    %1793 = vmatprep.subr.mxu0 %v1042
    %1794 = vmatpush2.msra.mxu0 %v1041
    %1795 = vmatprep.subr.mxu0 %v1040
    %1796 = vmatpush2.msra.mxu0 %v1039
    %1797 = vmatprep.subr.mxu0 %v1038
    %1798 = vmatpush2.msra.mxu0 %v1037
    %1799 = vmatprep.subr.mxu0 %v1036
    %1800 = vmatpush2.msra.mxu0 %v1035
    %1801 = vmatprep.subr.mxu0 %v1034
    %1802 = vmatpush2.msra.mxu0 %v1033
    %1803 = vmatprep.subr.mxu0 %v1032
    %1804 = vmatpush2.msra.mxu0 %v1031
    %1805 = vmatprep.subr.mxu0 %v1030
    %1806 = vmatpush2.msra.mxu0 %v1029
    %1807 = vmatprep.subr.mxu0 %v1028
    %1808 = vmatpush2.msra.mxu0 %v1027
    %1809 = vmatprep.subr.mxu0 %v1026
    %1810 = vmatpush2.msra.mxu0 %v1025
    %1811 = vmatprep.subr.mxu0 %v1024
    %1812 = vmatpush2.msra.mxu0 %v1023
    %1813 = vmatprep.subr.mxu0 %v1022
    %1814 = vmatpush2.msra.mxu0 %v1021
    %1815 = vmatprep.subr.mxu0 %v1020
    %1816 = vmatpush2.msra.mxu0 %v1019
    %1817 = vmatprep.subr.mxu0 %v1018
    %1818 = vmatpush2.msra.mxu0 %v1017
    %1819 = vmatprep.subr.mxu0 %v1016
    %1820 = vmatpush2.msra.mxu0 %v1015
    %1821 = vmatprep.subr.mxu0 %v1014
    %1822 = vmatpush2.msra.mxu0 %v1013
    %1823 = vmatprep.mubr.f32.mxu0 %v1642
    %1824 = vmatmul.mubr.f32.gmra.mxu0 %v1641
    %v1825 = vpop.f32.mrf.mxu0
    %v1826 = vadd.f32 0.0, %v1825
    %v1827 = vpop.f32.mrf.mxu0
    %v1828 = vadd.f32 0.0, %v1827
    %1829 = vmatprep.mubr.f32.mxu0 %v1644
    %1830 = vmatmul.mubr.f32.gmra.mxu0 %v1643
    %v1831 = vpop.f32.mrf.mxu0
    %v1832 = vadd.f32 0.0, %v1831
    %v1833 = vpop.f32.mrf.mxu0
    %v1834 = vadd.f32 0.0, %v1833
    %1835 = vdwg.mxu0
    %v1836 = vadd.f32 %v1755, %v1826
    %v1837 = vadd.f32 %v1756, %v1828
    %v1838 = vadd.f32 %v1757, %v1832
    %v1839 = vadd.f32 %v1758, %v1834
    %v1840 = vtanh.pop %v1836
    %v1841 = vtanh.pop %v1837
    %v1842 = vtanh.pop %v1838
    %v1843 = vtanh.pop %v1839
    %s1844 = scalar_lea.vmem [#allocation6], 1024
    %v1845 = vld [vmem:[%s1844] sm:$0xff]
    %v1846 = vld [vmem:[%s1844 + $0x8] sm:$0xff]
    %v1847 = vld [vmem:[%s1844 + $0x10] sm:$0xff]
    %v1848 = vld [vmem:[%s1844 + $0x18] sm:$0xff]
    %v1849 = vld [vmem:[%s1844 + $0x20] sm:$0xff]
    %v1850 = vld [vmem:[%s1844 + $0x28] sm:$0xff]
    %v1851 = vld [vmem:[%s1844 + $0x30] sm:$0xff]
    %v1852 = vld [vmem:[%s1844 + $0x38] sm:$0xff]
    %v1853 = vld [vmem:[%s1844 + $0x40] sm:$0xff]
    %v1854 = vld [vmem:[%s1844 + $0x48] sm:$0xff]
    %v1855 = vld [vmem:[%s1844 + $0x50] sm:$0xff]
    %v1856 = vld [vmem:[%s1844 + $0x58] sm:$0xff]
    %v1857 = vld [vmem:[%s1844 + $0x60] sm:$0xff]
    %v1858 = vld [vmem:[%s1844 + $0x68] sm:$0xff]
    %v1859 = vld [vmem:[%s1844 + $0x70] sm:$0xff]
    %v1860 = vld [vmem:[%s1844 + $0x78] sm:$0xff]
    %v1861 = vld [vmem:[%s1844 + $0x80] sm:$0xff]
    %v1862 = vld [vmem:[%s1844 + $0x88] sm:$0xff]
    %v1863 = vld [vmem:[%s1844 + $0x90] sm:$0xff]
    %v1864 = vld [vmem:[%s1844 + $0x98] sm:$0xff]
    %v1865 = vld [vmem:[%s1844 + $0xa0] sm:$0xff]
    %v1866 = vld [vmem:[%s1844 + $0xa8] sm:$0xff]
    %v1867 = vld [vmem:[%s1844 + $0xb0] sm:$0xff]
    %v1868 = vld [vmem:[%s1844 + $0xb8] sm:$0xff]
    %v1869 = vld [vmem:[%s1844 + $0xc0] sm:$0xff]
    %v1870 = vld [vmem:[%s1844 + $0xc8] sm:$0xff]
    %v1871 = vld [vmem:[%s1844 + $0xd0] sm:$0xff]
    %v1872 = vld [vmem:[%s1844 + $0xd8] sm:$0xff]
    %v1873 = vld [vmem:[%s1844 + $0xe0] sm:$0xff]
    %v1874 = vld [vmem:[%s1844 + $0xe8] sm:$0xff]
    %v1875 = vld [vmem:[%s1844 + $0xf0] sm:$0xff]
    %v1876 = vld [vmem:[%s1844 + $0xf8] sm:$0xff]
    %1877 = vmatprep.subr.mxu0 0.0
    %1878 = vmatpush1.msra.mxu0 %v1860
    %1879 = vmatprep.subr.mxu0 0.0
    %1880 = vmatpush1.msra.mxu0 %v1859
    %1881 = vmatprep.subr.mxu0 0.0
    %1882 = vmatpush1.msra.mxu0 %v1858
    %1883 = vmatprep.subr.mxu0 0.0
    %1884 = vmatpush1.msra.mxu0 %v1857
    %1885 = vmatprep.subr.mxu0 0.0
    %1886 = vmatpush1.msra.mxu0 %v1856
    %1887 = vmatprep.subr.mxu0 0.0
    %1888 = vmatpush1.msra.mxu0 %v1855
    %1889 = vmatprep.subr.mxu0 0.0
    %1890 = vmatpush1.msra.mxu0 %v1854
    %1891 = vmatprep.subr.mxu0 0.0
    %1892 = vmatpush1.msra.mxu0 %v1853
    %1893 = vmatprep.subr.mxu0 0.0
    %1894 = vmatpush1.msra.mxu0 %v1852
    %1895 = vmatprep.subr.mxu0 0.0
    %1896 = vmatpush1.msra.mxu0 %v1851
    %1897 = vmatprep.subr.mxu0 0.0
    %1898 = vmatpush1.msra.mxu0 %v1850
    %1899 = vmatprep.subr.mxu0 0.0
    %1900 = vmatpush1.msra.mxu0 %v1849
    %1901 = vmatprep.subr.mxu0 0.0
    %1902 = vmatpush1.msra.mxu0 %v1848
    %1903 = vmatprep.subr.mxu0 0.0
    %1904 = vmatpush1.msra.mxu0 %v1847
    %1905 = vmatprep.subr.mxu0 0.0
    %1906 = vmatpush1.msra.mxu0 %v1846
    %1907 = vmatprep.subr.mxu0 0.0
    %1908 = vmatpush1.msra.mxu0 %v1845
    %1909 = vmatprep.subr.mxu0 0.0
    %1910 = vmatpush2.msra.mxu0 %v1876
    %1911 = vmatprep.subr.mxu0 0.0
    %1912 = vmatpush2.msra.mxu0 %v1875
    %1913 = vmatprep.subr.mxu0 0.0
    %1914 = vmatpush2.msra.mxu0 %v1874
    %1915 = vmatprep.subr.mxu0 0.0
    %1916 = vmatpush2.msra.mxu0 %v1873
    %1917 = vmatprep.subr.mxu0 0.0
    %1918 = vmatpush2.msra.mxu0 %v1872
    %1919 = vmatprep.subr.mxu0 0.0
    %1920 = vmatpush2.msra.mxu0 %v1871
    %1921 = vmatprep.subr.mxu0 0.0
    %1922 = vmatpush2.msra.mxu0 %v1870
    %1923 = vmatprep.subr.mxu0 0.0
    %1924 = vmatpush2.msra.mxu0 %v1869
    %1925 = vmatprep.subr.mxu0 0.0
    %1926 = vmatpush2.msra.mxu0 %v1868
    %1927 = vmatprep.subr.mxu0 0.0
    %1928 = vmatpush2.msra.mxu0 %v1867
    %1929 = vmatprep.subr.mxu0 0.0
    %1930 = vmatpush2.msra.mxu0 %v1866
    %1931 = vmatprep.subr.mxu0 0.0
    %1932 = vmatpush2.msra.mxu0 %v1865
    %1933 = vmatprep.subr.mxu0 0.0
    %1934 = vmatpush2.msra.mxu0 %v1864
    %1935 = vmatprep.subr.mxu0 0.0
    %1936 = vmatpush2.msra.mxu0 %v1863
    %1937 = vmatprep.subr.mxu0 0.0
    %1938 = vmatpush2.msra.mxu0 %v1862
    %1939 = vmatprep.subr.mxu0 0.0
    %1940 = vmatpush2.msra.mxu0 %v1861
    %1941 = vmatprep.mubr.f32.mxu0 %v1841
    %1942 = vmatmul.mubr.f32.gmra.mxu0 %v1840
    %v1943 = vpop.f32.mrf.mxu0
    %v1944 = vadd.f32 0.0, %v1943
    %v1945 = vpop.f32.mrf.mxu0
    %1946 = vmatprep.mubr.f32.mxu0 %v1843
    %1947 = vmatmul.mubr.f32.gmra.mxu0 %v1842
    %v1948 = vpop.f32.mrf.mxu0
    %v1949 = vadd.f32 0.0, %v1948
    %v1950 = vpop.f32.mrf.mxu0
    %1951 = vdwg.mxu0
    %v1952 = vadd.f32 %v1753, %v1944
    %v1953 = vadd.f32 %v1754, %v1949
    %v1954 = vld [vmem:[%s5] sm:$0x1]
    %v1956 = vlaneseq
    %v1957 = vshrl.u32 %v1956, 7
    %v1958 = vsub.s32 0, %v1957
    %v1959 = vrot.slane %v1954, %v1958
    %v1961 = vadd.f32 %v1952, %v1959
    %v1962 = vadd.f32 %v1953, %v1959
    %1963 = vst [vmem:[%s9] sm:$0xff] %v1961
    %1964 = vst [vmem:[%s9 + $0x8] sm:$0xff] %v1962
    // Predicated region
    $region42: #{rnn_forward.1} parent=1 // pred_check
      _
    $region43: #{rnn_forward.1} parent=1 // pred_check_branch
      %1966 = sbr.rel (0) target = $region45
    $region44: #{rnn_forward.1} parent=1 // pred_region
      _
    $region45: #{rnn_forward.1} parent=1 // pred_fallthru
      _
    // Predicated region
    $region46: #{rnn_forward.1} parent=1 // pred_check
      _
    $region47: #{rnn_forward.1} parent=1 // pred_check_branch
      %1968 = sbr.rel (0) target = $region49
    $region48: #{rnn_forward.1} parent=1 // pred_region
      _
    $region49: #{rnn_forward.1} parent=1 // pred_fallthru
      _
    %1969 = vsyncpa [#allocation9], 1
  %1970 = vsyncmov [#allocation7]
  %s1971 = vpop.sfrf %1970
  %p1972 = scmp.eq.s32.totalorder %s1971, 0
  %p1973 = pneg %p1972
  %1975 = shalt.err (%p1973)
  %s1976 = scalar_lea.sflag [#allocation7], 1
  %1977 = vsyncmov %s1976
  %s1978 = vpop.sfrf %1977
  %p1979 = scmp.eq.s32.totalorder %s1978, 0
  %p1980 = pneg %p1979
  %1982 = shalt.err (%p1980)
  %s1983 = scalar_lea.sflag [#allocation7], 2
  %1984 = vsyncmov %s1983
  %s1985 = vpop.sfrf %1984
  %p1986 = scmp.eq.s32.totalorder %s1985, 0
  %p1987 = pneg %p1986
  %1989 = shalt.err (%p1987)

</llo_original>
